<compile_context>
chip_gen: v7x
topology: tpu7x:2x2x1
jax: 0.10.0
libtpu: 0.0.40
codegen_flags: <defaults>
</compile_context>

<pallas_src>
import jax
import jax.numpy as jnp
from jax import lax
from jax.experimental import pallas as pl
from jax.experimental.pallas import tpu as pltpu

_MM_DTYPE = jnp.bfloat16      # MXU operand dtype (accumulation stays f32)
_CONV_PAD = 8                 # >= d_conv - 1 and a multiple of 8 (sublane aligned)


def _sigmoid(x):
    return 1.0 / (1.0 + jnp.exp(-x))


def _softplus(x):
    # numerically stable softplus
    return jnp.maximum(x, 0.0) + jnp.log(1.0 + jnp.exp(-jnp.abs(x)))


def _pick_chunk(L, target=256):
    """Largest divisor of L that is <= target (falls back to L)."""
    if L <= target:
        return L
    best = 1
    for c in range(1, target + 1):
        if L % c == 0:
            best = c
    return best if best >= 8 else L


# ---------------------------------------------------------------------------
# Mamba block kernel: one grid step == one batch element.
# ---------------------------------------------------------------------------
def mamba_kernel(x_ref, w_in_ref, conv_w_ref, conv_b_ref, w_xp_ref, b_dt_ref,
                 a_t_ref, d_ref, w_out_ref, o_ref, da_sc, dbu_sc):
    L = x_ref.shape[1]
    d_in = conv_w_ref.shape[1]
    n_state = a_t_ref.shape[0]
    k_conv = conv_w_ref.shape[0]
    Lc = da_sc.shape[0]
    n_chunks = L // Lc

    # ---- in_proj: one merged (D, 2*d_in) matmul, slice into conv input / gate
    x = x_ref[0].astype(_MM_DTYPE)                                    # (L, D)
    xz = jnp.dot(x, w_in_ref[...], preferred_element_type=jnp.float32)
    xc = xz[:, :d_in]                                                 # (L, d_in)
    z = xz[:, d_in:]                                                  # (L, d_in)

    # ---- depthwise causal conv1d (kernel k_conv, left pad) + SiLU ----------
    # 8-row zero prefix keeps the padded buffer sublane-aligned.
    xpad = jnp.concatenate(
        [jnp.zeros((_CONV_PAD, d_in), jnp.float32), xc], axis=0)      # (L+8, d_in)
    conv = xc * conv_w_ref[pl.ds(k_conv - 1, 1), :]
    for k in range(k_conv - 1):                                       # static unroll
        s = k_conv - 1 - k
        conv = conv + (xpad[_CONV_PAD - s:_CONV_PAD - s + L, :]
                       * conv_w_ref[pl.ds(k, 1), :])
    conv = conv + conv_b_ref[...]
    u = conv * _sigmoid(conv)                                         # (L, d_in)

    # ---- fused x_proj / dt_proj: u @ [w_xp_dt @ w_dt | w_B | w_C] ----------
    xp = jnp.dot(u.astype(_MM_DTYPE), w_xp_ref[...],
                 preferred_element_type=jnp.float32)                  # (L, d_in+2N)
    dt = _softplus(xp[:, :d_in] + b_dt_ref[...])                      # (L, d_in)
    b_mat = xp[:, d_in:d_in + n_state]                                # (L, N)
    c_mat = xp[:, d_in + n_state:]                                    # (L, N)

    dtu = dt * u
    a_t = a_t_ref[...]                                                # (N, d_in) = (-exp(A_log)).T
    silu_z = z * _sigmoid(z)

    # ---- selective scan, chunked along time --------------------------------
    # State layout is lane-major: (n_state, d_in) with d_in on lanes.  The
    # running state h lives in the fori_loop carry (vregs); the dA scratch is
    # reused to store per-step hidden states for the vectorized C-contraction.
    h = jnp.zeros((n_state, d_in), jnp.float32)
    y_parts = []
    for ci in range(n_chunks):                                        # static chunk loop
        c0 = ci * Lc
        dt_c = dt[c0:c0 + Lc]                                         # (Lc, d_in)
        # dA[t,n,c] = exp(dt[t,c] * A[c,n]);  dBu[t,n,c] = dt[t,c]*u[t,c]*B[t,n]
        da_sc[...] = jnp.exp(dt_c[:, None, :] * a_t[None, :, :])
        dbu_sc[...] = dtu[c0:c0 + Lc][:, None, :] * b_mat[c0:c0 + Lc][:, :, None]

        def scan_body(t, h_carry):
            h_new = da_sc[t] * h_carry + dbu_sc[t]                    # (N, d_in)
            da_sc[t] = h_new                                          # reuse dA buffer as h storage
            return h_new

        h = lax.fori_loop(0, Lc, scan_body, h)

        # y[t, c] = sum_n h[t, n, c] * C[t, n]
        y_parts.append(
            jnp.sum(da_sc[...] * c_mat[c0:c0 + Lc][:, :, None], axis=1))

    y = y_parts[0] if n_chunks == 1 else jnp.concatenate(y_parts, axis=0)
    y = (y + u * d_ref[...]) * silu_z                                 # D skip + SiLU(z) gate

    # ---- out_proj (BiMamba 1x1-conv proj already folded in; lane-dense) ----
    o_ref[0] = jnp.dot(y.astype(_MM_DTYPE), w_out_ref[...],
                       preferred_element_type=jnp.float32)


def mamba_forward(x_bld, kp, Lc):
    """x_bld: (B, L, D) f32 -> (B, L, Dp) f32 (out_proj already proj-folded & padded)."""
    B, L, D = x_bld.shape
    d_in = kp["conv_w"].shape[1]
    n_state = kp["a_t"].shape[0]
    Dp = kp["w_out"].shape[1]

    weights = [kp["w_in"], kp["conv_w"], kp["conv_b"], kp["w_xp"],
               kp["b_dt"], kp["a_t"], kp["d"], kp["w_out"]]

    def full_spec(arr):
        nd = arr.ndim
        return pl.BlockSpec(arr.shape, lambda b, _nd=nd: (0,) * _nd)

    # Only raise the scoped-VMEM limit when the scratches actually need it
    # (keeps the small-shape path on every chip's default fast path).
    scratch_bytes = 2 * Lc * n_state * d_in * 4
    interm_bytes = 16 * L * d_in * 4 + 2 * L * (D + Dp) * 4
    need = scratch_bytes + interm_bytes
    vmem_limit = None if need <= 12 * 2**20 else min(int(1.5 * need), 60 * 2**20)

    return pl.pallas_call(
        mamba_kernel,
        out_shape=jax.ShapeDtypeStruct((B, L, Dp), jnp.float32),
        grid_spec=pltpu.PrefetchScalarGridSpec(
            num_scalar_prefetch=0,
            grid=(B,),
            in_specs=[pl.BlockSpec((1, L, D), lambda b: (b, 0, 0))]
                     + [full_spec(w) for w in weights],
            out_specs=pl.BlockSpec((1, L, Dp), lambda b: (b, 0, 0)),
            scratch_shapes=[
                pltpu.VMEM((Lc, n_state, d_in), jnp.float32),   # dA / hidden states
                pltpu.VMEM((Lc, n_state, d_in), jnp.float32),   # dB * u
            ]),
        compiler_params=pltpu.CompilerParams(
            dimension_semantics=("parallel",),     # batch steps are independent
            vmem_limit_bytes=vmem_limit),
    )(x_bld, *weights)


# ---------------------------------------------------------------------------
# Weight folding (done once in the wrapper; mathematically identical)
# ---------------------------------------------------------------------------
def fold_mamba_params(p, w_proj_half, d_out_pad):
    w_in = jnp.concatenate([p["w_in_x"], p["w_in_z"]], axis=1)         # (D, 2*d_in)
    w_dt_eff = p["w_xp_dt"] @ p["w_dt"]                                # (d_in, d_in)
    w_xp = jnp.concatenate([w_dt_eff, p["w_xp_B"], p["w_xp_C"]], axis=1)
    w_out = p["w_out"] @ w_proj_half                                   # (d_in, D_out)
    d_out = w_out.shape[1]
    if d_out_pad > d_out:                                              # lane-dense output
        w_out = jnp.pad(w_out, ((0, 0), (0, d_out_pad - d_out)))
    a_t = jnp.transpose(-jnp.exp(p["A_log"]))                          # (N, d_in)
    return {
        "w_in": w_in.astype(_MM_DTYPE),
        "conv_w": p["conv_w"],
        "conv_b": p["conv_b"],
        "w_xp": w_xp.astype(_MM_DTYPE),
        "b_dt": p["b_dt"],
        "a_t": a_t,
        "d": p["D"],
        "w_out": w_out.astype(_MM_DTYPE),
    }


# ---------------------------------------------------------------------------
# BiMamba forward (glue: permutes / flip / add are plain JAX)
# ---------------------------------------------------------------------------
def bimamba_forward(x_ncl, params_f, params_b, w_proj, b_proj):
    """x_ncl: (B, hidden_dim, L) NCL -> (B, hidden_dim, L)."""
    B, D, L = x_ncl.shape
    Dp = ((D + 127) // 128) * 128                # lane-dense kernel output width
    Lc = _pick_chunk(L)

    x_bld = jnp.transpose(x_ncl, (0, 2, 1))      # (B, L, D)
    x_rev = x_bld[:, ::-1, :]                    # reversed sequence for mamba_b

    # Epilogue fusion:  cat(y_f, y_b) @ w_proj + b == y_f @ w_proj[:D] + y_b @ w_proj[D:] + b,
    # so each direction's out_proj absorbs its half of the 1x1-conv proj weight.
    kp_f = fold_mamba_params(params_f, w_proj[:D, :], Dp)
    kp_b = fold_mamba_params(params_b, w_proj[D:, :], Dp)

    y_f = mamba_forward(x_bld, kp_f, Lc)         # (B, L, Dp)
    # NOTE: backward output is NOT flipped back before combining (matches the
    # provided torch code, which concatenates mamba_b(reversed) directly).
    y_b = mamba_forward(x_rev, kp_b, Lc)         # (B, L, Dp)

    y = y_f[:, :, :D] + y_b[:, :, :D] + b_proj   # (B, L, D)
    return jnp.transpose(y, (0, 2, 1))           # (B, D, L)


# ---------------------------------------------------------------------------
# Deterministic parameter construction (shapes from the module's __init__)
# ---------------------------------------------------------------------------
def init_mamba_params(key, d_model):
    d_inner = 2 * d_model
    d_state = 16
    d_conv = 4
    dt_rank = (d_model + 15) // 16
    ks = jax.random.split(key, 6)
    scale = 0.1

    w_in = jax.random.normal(ks[0], (d_model, 2 * d_inner), jnp.float32) * scale
    w_xp = jax.random.normal(ks[1], (d_inner, dt_rank + 2 * d_state), jnp.float32) * scale

    a_log = jnp.log(jnp.broadcast_to(
        jnp.arange(1, d_state + 1, dtype=jnp.float32)[None, :],
        (d_inner, d_state)))

    return {
        "w_in_x": w_in[:, :d_inner],
        "w_in_z": w_in[:, d_inner:],
        "conv_w": jax.random.normal(ks[2], (d_conv, d_inner), jnp.float32) * scale,
        "conv_b": jnp.zeros((1, d_inner), jnp.float32),
        "w_xp_dt": w_xp[:, :dt_rank],
        "w_xp_B": w_xp[:, dt_rank:dt_rank + d_state],
        "w_xp_C": w_xp[:, dt_rank + d_state:],
        "w_dt": jax.random.normal(ks[3], (dt_rank, d_inner), jnp.float32) * scale,
        "b_dt": jax.random.uniform(ks[4], (1, d_inner), jnp.float32,
                                   minval=-4.0, maxval=-2.0),
        "A_log": a_log,
        "D": jnp.ones((1, d_inner), jnp.float32),
        "w_out": jax.random.normal(ks[5], (d_inner, d_model), jnp.float32) * scale,
    }


if __name__ == "__main__":
    key = jax.random.PRNGKey(0)
    k_x, k_f, k_b, k_p = jax.random.split(key, 4)

    B, hidden_dim, L = 2, 32, 16
    x = jax.random.normal(k_x, (B, hidden_dim, L), jnp.float32)   # (B, C, L) NCL

    params_f = init_mamba_params(k_f, hidden_dim)
    params_b = init_mamba_params(k_b, hidden_dim)
    # proj: Conv1d(2*hidden_dim -> hidden_dim, kernel_size=1)
    w_proj = jax.random.normal(k_p, (2 * hidden_dim, hidden_dim), jnp.float32) * 0.1
    b_proj = jnp.zeros((1, hidden_dim), jnp.float32)

    out = bimamba_forward(x, params_f, params_b, w_proj, b_proj)
    out = jax.block_until_ready(out)
    assert out.shape == (B, hidden_dim, L), out.shape
    assert bool(jnp.all(jnp.isfinite(out)))
    print("KERNEL_OK")
</pallas_src>

<mosaic_0001>
module attributes {stable_mosaic.version = 11 : i64} {
  func.func @mamba_kernel(%arg0: i32, %arg1: memref<1x16x32xf32, #tpu.memory_space<vmem>>, %arg2: memref<32x128xbf16, #tpu.memory_space<vmem>>, %arg3: memref<4x64xf32, #tpu.memory_space<vmem>>, %arg4: memref<1x64xf32, #tpu.memory_space<vmem>>, %arg5: memref<64x96xbf16, #tpu.memory_space<vmem>>, %arg6: memref<1x64xf32, #tpu.memory_space<vmem>>, %arg7: memref<16x64xf32, #tpu.memory_space<vmem>>, %arg8: memref<1x64xf32, #tpu.memory_space<vmem>>, %arg9: memref<64x128xbf16, #tpu.memory_space<vmem>>, %arg10: memref<1x16x128xf32, #tpu.memory_space<vmem>>, %arg11: memref<16x16x64xf32, #tpu.memory_space<vmem>>, %arg12: memref<16x16x64xf32, #tpu.memory_space<vmem>>) attributes {dimension_semantics = [#tpu.dimension_semantics<parallel>], iteration_bounds = array<i64: 2>, scalar_prefetch = 0 : i64, scratch_operands = 2 : i64, tpu.core_type = #tpu.core_type<tc>, window_params = [{transform_indices = @transform_0, window_bounds = array<i64: 1, 16, 32>}, {pipeline_mode = #tpu.pipeline_mode<synchronous>, transform_indices = @transform_1, window_bounds = array<i64: 32, 128>}, {pipeline_mode = #tpu.pipeline_mode<synchronous>, transform_indices = @transform_2, window_bounds = array<i64: 4, 64>}, {pipeline_mode = #tpu.pipeline_mode<synchronous>, transform_indices = @transform_3, window_bounds = array<i64: 1, 64>}, {pipeline_mode = #tpu.pipeline_mode<synchronous>, transform_indices = @transform_4, window_bounds = array<i64: 64, 96>}, {pipeline_mode = #tpu.pipeline_mode<synchronous>, transform_indices = @transform_5, window_bounds = array<i64: 1, 64>}, {pipeline_mode = #tpu.pipeline_mode<synchronous>, transform_indices = @transform_6, window_bounds = array<i64: 16, 64>}, {pipeline_mode = #tpu.pipeline_mode<synchronous>, transform_indices = @transform_7, window_bounds = array<i64: 1, 64>}, {pipeline_mode = #tpu.pipeline_mode<synchronous>, transform_indices = @transform_8, window_bounds = array<i64: 64, 128>}, {transform_indices = @transform_9, window_bounds = array<i64: 1, 16, 128>}]} {
    %c0 = arith.constant 0 : index
    %c0_0 = arith.constant 0 : index
    %c0_1 = arith.constant 0 : index
    %0 = vector.load %arg1[%c0, %c0_0, %c0_1] : memref<1x16x32xf32, #tpu.memory_space<vmem>>, vector<1x16x32xf32>
    %1 = vector.shape_cast %0 : vector<1x16x32xf32> to vector<16x32xf32>
    %2 = arith.truncf %1 : vector<16x32xf32> to vector<16x32xbf16>
    %c0_2 = arith.constant 0 : index
    %c0_3 = arith.constant 0 : index
    %3 = vector.load %arg2[%c0_2, %c0_3] : memref<32x128xbf16, #tpu.memory_space<vmem>>, vector<32x128xbf16>
    %cst = arith.constant dense<0.000000e+00> : vector<16x128xf32>
    %4 = tpu.matmul %2, %3, %cst {dimension_numbers = #tpu.dot_dimension_numbers<[1], [0], [0], [1], [0, 0, 1, 1], [], []>} : vector<16x32xbf16>, vector<32x128xbf16>, vector<16x128xf32> -> vector<16x128xf32>
    %5 = vector.extract_strided_slice %4 {offsets = [0, 0], sizes = [16, 64], strides = [1, 1]} : vector<16x128xf32> to vector<16x64xf32>
    %6 = vector.extract_strided_slice %4 {offsets = [0, 64], sizes = [16, 64], strides = [1, 1]} : vector<16x128xf32> to vector<16x64xf32>
    %cst_4 = arith.constant 0.000000e+00 : f32
    %7 = vector.broadcast %cst_4 : f32 to vector<8x64xf32>
    %8 = tpu.concatenate %7, %5 in 0 : vector<8x64xf32>, vector<16x64xf32> -> vector<24x64xf32>
    %c3 = arith.constant 3 : index
    %c0_5 = arith.constant 0 : index
    %9 = vector.load %arg3[%c3, %c0_5] : memref<4x64xf32, #tpu.memory_space<vmem>>, vector<1x64xf32>
    %10 = vector.broadcast %9 : vector<1x64xf32> to vector<16x64xf32>
    %11 = arith.mulf %5, %10 : vector<16x64xf32>
    %12 = vector.extract_strided_slice %8 {offsets = [5, 0], sizes = [16, 64], strides = [1, 1]} : vector<24x64xf32> to vector<16x64xf32>
    %c0_6 = arith.constant 0 : index
    %c0_7 = arith.constant 0 : index
    %13 = vector.load %arg3[%c0_6, %c0_7] : memref<4x64xf32, #tpu.memory_space<vmem>>, vector<1x64xf32>
    %14 = vector.broadcast %13 : vector<1x64xf32> to vector<16x64xf32>
    %15 = arith.mulf %12, %14 : vector<16x64xf32>
    %16 = arith.addf %11, %15 : vector<16x64xf32>
    %17 = vector.extract_strided_slice %8 {offsets = [6, 0], sizes = [16, 64], strides = [1, 1]} : vector<24x64xf32> to vector<16x64xf32>
    %c1 = arith.constant 1 : index
    %c0_8 = arith.constant 0 : index
    %18 = vector.load %arg3[%c1, %c0_8] : memref<4x64xf32, #tpu.memory_space<vmem>>, vector<1x64xf32>
    %19 = vector.broadcast %18 : vector<1x64xf32> to vector<16x64xf32>
    %20 = arith.mulf %17, %19 : vector<16x64xf32>
    %21 = arith.addf %16, %20 : vector<16x64xf32>
    %22 = vector.extract_strided_slice %8 {offsets = [7, 0], sizes = [16, 64], strides = [1, 1]} : vector<24x64xf32> to vector<16x64xf32>
    %c2 = arith.constant 2 : index
    %c0_9 = arith.constant 0 : index
    %23 = vector.load %arg3[%c2, %c0_9] : memref<4x64xf32, #tpu.memory_space<vmem>>, vector<1x64xf32>
    %24 = vector.broadcast %23 : vector<1x64xf32> to vector<16x64xf32>
    %25 = arith.mulf %22, %24 : vector<16x64xf32>
    %26 = arith.addf %21, %25 : vector<16x64xf32>
    %c0_10 = arith.constant 0 : index
    %c0_11 = arith.constant 0 : index
    %27 = vector.load %arg4[%c0_10, %c0_11] : memref<1x64xf32, #tpu.memory_space<vmem>>, vector<1x64xf32>
    %28 = vector.broadcast %27 : vector<1x64xf32> to vector<16x64xf32>
    %29 = arith.addf %26, %28 : vector<16x64xf32>
    %cst_12 = arith.constant 0.000000e+00 : f32
    %30 = vector.broadcast %cst_12 : f32 to vector<16x64xf32>
    %31 = arith.subf %30, %29 : vector<16x64xf32>
    %32 = math.exp %31 : vector<16x64xf32>
    %cst_13 = arith.constant 1.000000e+00 : f32
    %33 = vector.broadcast %cst_13 : f32 to vector<16x64xf32>
    %34 = arith.addf %33, %32 : vector<16x64xf32>
    %cst_14 = arith.constant 1.000000e+00 : f32
    %35 = vector.broadcast %cst_14 : f32 to vector<16x64xf32>
    %36 = arith.divf %35, %34 : vector<16x64xf32>
    %37 = arith.mulf %29, %36 : vector<16x64xf32>
    %38 = arith.truncf %37 : vector<16x64xf32> to vector<16x64xbf16>
    %c0_15 = arith.constant 0 : index
    %c0_16 = arith.constant 0 : index
    %39 = vector.load %arg5[%c0_15, %c0_16] : memref<64x96xbf16, #tpu.memory_space<vmem>>, vector<64x96xbf16>
    %cst_17 = arith.constant dense<0.000000e+00> : vector<16x96xf32>
    %40 = tpu.matmul %38, %39, %cst_17 {dimension_numbers = #tpu.dot_dimension_numbers<[1], [0], [0], [1], [0, 0, 1, 1], [], []>} : vector<16x64xbf16>, vector<64x96xbf16>, vector<16x96xf32> -> vector<16x96xf32>
    %41 = vector.extract_strided_slice %40 {offsets = [0, 0], sizes = [16, 64], strides = [1, 1]} : vector<16x96xf32> to vector<16x64xf32>
    %c0_18 = arith.constant 0 : index
    %c0_19 = arith.constant 0 : index
    %42 = vector.load %arg6[%c0_18, %c0_19] : memref<1x64xf32, #tpu.memory_space<vmem>>, vector<1x64xf32>
    %43 = vector.broadcast %42 : vector<1x64xf32> to vector<16x64xf32>
    %44 = arith.addf %41, %43 : vector<16x64xf32>
    %cst_20 = arith.constant 0.000000e+00 : f32
    %45 = vector.broadcast %cst_20 : f32 to vector<16x64xf32>
    %46 = arith.maximumf %44, %45 : vector<16x64xf32>
    %47 = math.absf %44 : vector<16x64xf32>
    %cst_21 = arith.constant 0.000000e+00 : f32
    %48 = vector.broadcast %cst_21 : f32 to vector<16x64xf32>
    %49 = arith.subf %48, %47 : vector<16x64xf32>
    %50 = math.exp %49 : vector<16x64xf32>
    %cst_22 = arith.constant 1.000000e+00 : f32
    %51 = vector.broadcast %cst_22 : f32 to vector<16x64xf32>
    %52 = arith.addf %51, %50 : vector<16x64xf32>
    %53 = math.log %52 : vector<16x64xf32>
    %54 = arith.addf %46, %53 : vector<16x64xf32>
    %55 = vector.extract_strided_slice %40 {offsets = [0, 64], sizes = [16, 16], strides = [1, 1]} : vector<16x96xf32> to vector<16x16xf32>
    %56 = vector.extract_strided_slice %40 {offsets = [0, 80], sizes = [16, 16], strides = [1, 1]} : vector<16x96xf32> to vector<16x16xf32>
    %57 = arith.mulf %54, %37 : vector<16x64xf32>
    %c0_23 = arith.constant 0 : index
    %c0_24 = arith.constant 0 : index
    %58 = vector.load %arg7[%c0_23, %c0_24] : memref<16x64xf32, #tpu.memory_space<vmem>>, vector<16x64xf32>
    %cst_25 = arith.constant 0.000000e+00 : f32
    %59 = vector.broadcast %cst_25 : f32 to vector<16x64xf32>
    %60 = arith.subf %59, %6 : vector<16x64xf32>
    %61 = math.exp %60 : vector<16x64xf32>
    %cst_26 = arith.constant 1.000000e+00 : f32
    %62 = vector.broadcast %cst_26 : f32 to vector<16x64xf32>
    %63 = arith.addf %62, %61 : vector<16x64xf32>
    %cst_27 = arith.constant 1.000000e+00 : f32
    %64 = vector.broadcast %cst_27 : f32 to vector<16x64xf32>
    %65 = arith.divf %64, %63 : vector<16x64xf32>
    %66 = arith.mulf %6, %65 : vector<16x64xf32>
    %cst_28 = arith.constant 0.000000e+00 : f32
    %67 = vector.broadcast %cst_28 : f32 to vector<16x64xf32>
    %68 = vector.shape_cast %54 : vector<16x64xf32> to vector<16x1x64xf32>
    %69 = vector.shape_cast %58 : vector<16x64xf32> to vector<1x16x64xf32>
    %70 = vector.broadcast %68 : vector<16x1x64xf32> to vector<16x16x64xf32>
    %71 = vector.broadcast %69 : vector<1x16x64xf32> to vector<16x16x64xf32>
    %72 = arith.mulf %70, %71 : vector<16x16x64xf32>
    %73 = math.exp %72 : vector<16x16x64xf32>
    %c0_29 = arith.constant 0 : index
    %c0_30 = arith.constant 0 : index
    %c0_31 = arith.constant 0 : index
    %74 = vector.load %arg11[%c0_29, %c0_30, %c0_31] : memref<16x16x64xf32, #tpu.memory_space<vmem>>, vector<16x16x64xf32>
    tpu.vector_store %arg11[%c0_29, %c0_30, %c0_31], %73 {strides = array<i32>} : memref<16x16x64xf32, #tpu.memory_space<vmem>>, vector<16x16x64xf32>,
    %75 = vector.shape_cast %57 : vector<16x64xf32> to vector<16x1x64xf32>
    %76 = vector.shape_cast %55 : vector<16x16xf32> to vector<16x16x1xf32>
    %77 = vector.broadcast %75 : vector<16x1x64xf32> to vector<16x16x64xf32>
    %78 = vector.broadcast %76 : vector<16x16x1xf32> to vector<16x16x64xf32>
    %79 = arith.mulf %77, %78 : vector<16x16x64xf32>
    %c0_32 = arith.constant 0 : index
    %c0_33 = arith.constant 0 : index
    %c0_34 = arith.constant 0 : index
    %80 = vector.load %arg12[%c0_32, %c0_33, %c0_34] : memref<16x16x64xf32, #tpu.memory_space<vmem>>, vector<16x16x64xf32>
    tpu.vector_store %arg12[%c0_32, %c0_33, %c0_34], %79 {strides = array<i32>} : memref<16x16x64xf32, #tpu.memory_space<vmem>>, vector<16x16x64xf32>,
    %c0_i32 = arith.constant 0 : i32
    %c16_i32 = arith.constant 16 : i32
    %81 = arith.addi %c0_i32, %c16_i32 : i32
    %c1_i32 = arith.constant 1 : i32
    %82 = scf.for %arg13 = %c0_i32 to %81 step %c1_i32 iter_args(%arg14 = %67) -> (vector<16x64xf32>)  : i32 {
      %99 = arith.index_cast %arg13 : i32 to index
      %c0_48 = arith.constant 0 : index
      %c0_49 = arith.constant 0 : index
      %100 = vector.load %arg11[%99, %c0_48, %c0_49] : memref<16x16x64xf32, #tpu.memory_space<vmem>>, vector<1x16x64xf32>
      %101 = vector.shape_cast %100 : vector<1x16x64xf32> to vector<16x64xf32>
      %102 = arith.mulf %101, %arg14 : vector<16x64xf32>
      %103 = arith.index_cast %arg13 : i32 to index
      %c0_50 = arith.constant 0 : index
      %c0_51 = arith.constant 0 : index
      %104 = vector.load %arg12[%103, %c0_50, %c0_51] : memref<16x16x64xf32, #tpu.memory_space<vmem>>, vector<1x16x64xf32>
      %105 = vector.shape_cast %104 : vector<1x16x64xf32> to vector<16x64xf32>
      %106 = arith.addf %102, %105 : vector<16x64xf32>
      %107 = arith.index_cast %arg13 : i32 to index
      %c0_52 = arith.constant 0 : index
      %c0_53 = arith.constant 0 : index
      %108 = vector.load %arg11[%107, %c0_52, %c0_53] : memref<16x16x64xf32, #tpu.memory_space<vmem>>, vector<1x16x64xf32>
      %109 = vector.shape_cast %108 : vector<1x16x64xf32> to vector<16x64xf32>
      %110 = vector.shape_cast %106 : vector<16x64xf32> to vector<1x16x64xf32>
      tpu.vector_store %arg11[%107, %c0_52, %c0_53], %110 {strides = array<i32>} : memref<16x16x64xf32, #tpu.memory_space<vmem>>, vector<1x16x64xf32>,
      scf.yield %106 : vector<16x64xf32>
    }
    %c16_i32_35 = arith.constant 16 : i32
    %c0_36 = arith.constant 0 : index
    %c0_37 = arith.constant 0 : index
    %c0_38 = arith.constant 0 : index
    %83 = vector.load %arg11[%c0_36, %c0_37, %c0_38] : memref<16x16x64xf32, #tpu.memory_space<vmem>>, vector<16x16x64xf32>
    %84 = vector.shape_cast %56 : vector<16x16xf32> to vector<16x16x1xf32>
    %85 = vector.broadcast %84 : vector<16x16x1xf32> to vector<16x16x64xf32>
    %86 = arith.mulf %83, %85 : vector<16x16x64xf32>
    %cst_39 = arith.constant dense<0.000000e+00> : vector<16x64xf32>
    %87 = vector.multi_reduction <add>, %86, %cst_39 [1] : vector<16x16x64xf32> to vector<16x64xf32>
    %c0_40 = arith.constant 0 : index
    %c0_41 = arith.constant 0 : index
    %88 = vector.load %arg8[%c0_40, %c0_41] : memref<1x64xf32, #tpu.memory_space<vmem>>, vector<1x64xf32>
    %89 = vector.broadcast %88 : vector<1x64xf32> to vector<16x64xf32>
    %90 = arith.mulf %37, %89 : vector<16x64xf32>
    %91 = arith.addf %87, %90 : vector<16x64xf32>
    %92 = arith.mulf %91, %66 : vector<16x64xf32>
    %93 = arith.truncf %92 : vector<16x64xf32> to vector<16x64xbf16>
    %c0_42 = arith.constant 0 : index
    %c0_43 = arith.constant 0 : index
    %94 = vector.load %arg9[%c0_42, %c0_43] : memref<64x128xbf16, #tpu.memory_space<vmem>>, vector<64x128xbf16>
    %cst_44 = arith.constant dense<0.000000e+00> : vector<16x128xf32>
    %95 = tpu.matmul %93, %94, %cst_44 {dimension_numbers = #tpu.dot_dimension_numbers<[1], [0], [0], [1], [0, 0, 1, 1], [], []>} : vector<16x64xbf16>, vector<64x128xbf16>, vector<16x128xf32> -> vector<16x128xf32>
    %c0_45 = arith.constant 0 : index
    %c0_46 = arith.constant 0 : index
    %c0_47 = arith.constant 0 : index
    %96 = vector.load %arg10[%c0_45, %c0_46, %c0_47] : memref<1x16x128xf32, #tpu.memory_space<vmem>>, vector<1x16x128xf32>
    %97 = vector.shape_cast %96 : vector<1x16x128xf32> to vector<16x128xf32>
    %98 = vector.shape_cast %95 : vector<16x128xf32> to vector<1x16x128xf32>
    tpu.vector_store %arg10[%c0_45, %c0_46, %c0_47], %98 {strides = array<i32>} : memref<1x16x128xf32, #tpu.memory_space<vmem>>, vector<1x16x128xf32>,
    return
  }
  func.func @transform_0(%arg0: i32) -> (i32, i32, i32) {
    %c0_i32 = arith.constant 0 : i32
    %c0_i32_0 = arith.constant 0 : i32
    %c0_i32_1 = arith.constant 0 : i32
    return %arg0, %c0_i32, %c0_i32_0 : i32, i32, i32
  }
  func.func @transform_1(%arg0: i32) -> (i32, i32) {
    %c0_i32 = arith.constant 0 : i32
    %c0_i32_0 = arith.constant 0 : i32
    %c0_i32_1 = arith.constant 0 : i32
    return %c0_i32, %c0_i32_0 : i32, i32
  }
  func.func @transform_2(%arg0: i32) -> (i32, i32) {
    %c0_i32 = arith.constant 0 : i32
    %c0_i32_0 = arith.constant 0 : i32
    %c0_i32_1 = arith.constant 0 : i32
    return %c0_i32, %c0_i32_0 : i32, i32
  }
  func.func @transform_3(%arg0: i32) -> (i32, i32) {
    %c0_i32 = arith.constant 0 : i32
    %c0_i32_0 = arith.constant 0 : i32
    %c0_i32_1 = arith.constant 0 : i32
    return %c0_i32, %c0_i32_0 : i32, i32
  }
  func.func @transform_4(%arg0: i32) -> (i32, i32) {
    %c0_i32 = arith.constant 0 : i32
    %c0_i32_0 = arith.constant 0 : i32
    %c0_i32_1 = arith.constant 0 : i32
    return %c0_i32, %c0_i32_0 : i32, i32
  }
  func.func @transform_5(%arg0: i32) -> (i32, i32) {
    %c0_i32 = arith.constant 0 : i32
    %c0_i32_0 = arith.constant 0 : i32
    %c0_i32_1 = arith.constant 0 : i32
    return %c0_i32, %c0_i32_0 : i32, i32
  }
  func.func @transform_6(%arg0: i32) -> (i32, i32) {
    %c0_i32 = arith.constant 0 : i32
    %c0_i32_0 = arith.constant 0 : i32
    %c0_i32_1 = arith.constant 0 : i32
    return %c0_i32, %c0_i32_0 : i32, i32
  }
  func.func @transform_7(%arg0: i32) -> (i32, i32) {
    %c0_i32 = arith.constant 0 : i32
    %c0_i32_0 = arith.constant 0 : i32
    %c0_i32_1 = arith.constant 0 : i32
    return %c0_i32, %c0_i32_0 : i32, i32
  }
  func.func @transform_8(%arg0: i32) -> (i32, i32) {
    %c0_i32 = arith.constant 0 : i32
    %c0_i32_0 = arith.constant 0 : i32
    %c0_i32_1 = arith.constant 0 : i32
    return %c0_i32, %c0_i32_0 : i32, i32
  }
  func.func @transform_9(%arg0: i32) -> (i32, i32, i32) {
    %c0_i32 = arith.constant 0 : i32
    %c0_i32_0 = arith.constant 0 : i32
    %c0_i32_1 = arith.constant 0 : i32
    return %arg0, %c0_i32, %c0_i32_0 : i32, i32, i32
  }
}

</mosaic_0001>

<llo_original>
// kernel: tpu_custom_call.1
$region0: #{tpu_custom_call.1}
  #allocation0 [shape = 'u32[]', space=smem, size = 0x4, offset = 0x4, fixed_abs, tag = 'smem constant byte address 0x4 - core index']
  #allocation1 [shape = 'u32[144,128]{1,0:T(1,128)}', space=vmem, size = 0x12000, scoped, tag = 'internal scratch']
  #allocation2 [shape = 'f32[16,16,64]{2,1,0:T(8,128)}', space=vmem, size = 0x20000, scoped, tag = 'scratch operand']
  #allocation3 [shape = 'f32[16,16,64]{2,1,0:T(8,128)}', space=vmem, size = 0x20000, scoped, tag = 'scratch operand']
  %s0 = inlined_call_operand.hbm [shape: f32[2,16,32], index: 0, kind: input, shape index: {}]
  %s1 = inlined_call_operand.hbm [shape: bf16[32,128], index: 1, kind: input, shape index: {}]
  %s2 = inlined_call_operand.vmem [shape: f32[4,64], index: 2, kind: input, shape index: {}]
  %s3 = inlined_call_operand.vmem [shape: f32[1,64], index: 3, kind: input, shape index: {}]
  %s4 = inlined_call_operand.hbm [shape: bf16[64,96], index: 4, kind: input, shape index: {}]
  %s5 = inlined_call_operand.vmem [shape: f32[1,64], index: 5, kind: input, shape index: {}]
  %s6 = inlined_call_operand.vmem [shape: f32[16,64], index: 6, kind: input, shape index: {}]
  %s7 = inlined_call_operand.vmem [shape: f32[1,64], index: 7, kind: input, shape index: {}]
  %s8 = inlined_call_operand.hbm [shape: bf16[64,128], index: 8, kind: input, shape index: {}]
  %s9 = inlined_call_operand.hbm [shape: f32[2,16,128], index: 9, kind: output, shape index: {}]
  %s10 = sld [smem:[#allocation0]]
  $region92: #{tpu_custom_call.1} parent=0
    _
  %s12 = ssub.s32 1, %s10
  %s13 = scalar_select 0, %s12, %s10
  $region1: #{tpu_custom_call.1} parent=0
    #allocation4 [shape = 'u8[16384]{0}', space=vmem, size = 0x4000, scoped, tag = 'input window, operand 0']
    #allocation5 [shape = 's32[2]{0}', space=sflag, size = 0x8, scoped, tag = 'scoped memory for tpu_custom_call.1']
    #allocation6 [shape = 's32[2]{0}', space=sflag, size = 0x8, scoped, tag = 'scoped memory for tpu_custom_call.1']
    #allocation7 [shape = 'u8[8192]{0}', space=vmem, size = 0x2000, scoped, tag = 'input window, operand 1, single buffered']
    #allocation8 [shape = 's32[1]{0}', space=sflag, size = 0x4, scoped, tag = 'scoped memory for tpu_custom_call.1']
    #allocation9 [shape = 'u8[16384]{0}', space=vmem, size = 0x4000, scoped, tag = 'input window, operand 4, single buffered']
    #allocation10 [shape = 'u8[16384]{0}', space=vmem, size = 0x4000, scoped, tag = 'input window, operand 8, single buffered']
    #allocation11 [shape = 's32[1]{0}', space=sflag, size = 0x4, scoped, tag = 'scoped memory for tpu_custom_call.1']
    #allocation12 [shape = 'u8[16384]{0}', space=vmem, size = 0x4000, scoped, tag = 'output window, operand 0']
    %14 = vsyncpa [#allocation5], 0
    %s15 = scalar_lea.sflag [#allocation5], 1
    %16 = vsyncpa %s15, 0
    %17 = vsyncpa [#allocation8], 0
    %18 = vsyncpa [#allocation11], 0
    %19 = vsyncpa [#allocation6], 0
    %s20 = scalar_lea.sflag [#allocation6], 1
    %21 = vsyncpa %s20, 0
    loop: start=0, step=1, limit=4
    $region2: #{tpu_custom_call.1} parent=1 // loop_pre_header
      _
    $region3: #{tpu_custom_call.1} parent=1 // loop_header
      %s23 = sphi 0, %s27
      %p24 = scmp.ge.s32.totalorder %s23, 4
      %s33 = sphi 0, %s35
      %s36 = sphi 0, %s33
      %s37 = sphi 0, %s36
      %s53 = sphi 0, %s37
      %s57 = sphi 0, %s57
      %s59 = sphi 0, %s57
      %s60 = sphi 0, %s59
      %s74 = sphi 0, %s60
      %s78 = sphi 0, %s78
      %s80 = sphi 0, %s78
      %s81 = sphi 0, %s80
      %s95 = sphi 0, %s81
      %s99 = sphi 0, %s99
      %s101 = sphi 0, %s99
      %s102 = sphi 0, %s101
      %s116 = sphi 0, %s102
      %s120 = sphi 0, %s120
      %s122 = sphi 0, %s120
      %s123 = sphi 0, %s122
      %s137 = sphi 0, %s123
      %s141 = sphi 0, %s141
      %s143 = sphi 0, %s141
      %s144 = sphi 0, %s143
      %s158 = sphi 0, %s144
      %s162 = sphi 0, %s162
      %s164 = sphi 0, %s162
      %s165 = sphi 0, %s164
      %s179 = sphi 0, %s165
      %s183 = sphi 0, %s183
      %s185 = sphi 0, %s183
      %s186 = sphi 0, %s185
      %s200 = sphi 0, %s186
      %s204 = sphi 0, %s204
      %s206 = sphi 0, %s204
      %s207 = sphi 0, %s206
      %s221 = sphi 0, %s207
      %s227 = sphi 0, %s229
      %s230 = sphi 0, %s227
      %s231 = sphi 0, %s230
      %s247 = sphi 0, %s231
    $region4: #{tpu_custom_call.1} parent=1 // loop_header_branch
      %26 = sbr.rel (%p24) target = $region8
    $region5: #{tpu_custom_call.1} parent=1 // loop_body
      %s28 = ssub.s32 %s23, 1
      %s29 = ssub.s32 %s23, 2
      %s30 = sadd.s32 %s23, 1
      %s31 = ssub.s32 %s23, %s30
      %p32 = scmp.eq.s32.totalorder %s31, 0
      %s34 = sadd.s32 %s33, 1
      %s35 = scalar_select %p32, %s33, %s34
      %p38 = pneg %p32
      %p39 = scmp.eq.s32.totalorder %s23, 1
      %p40 = por %p38, %p39
      %p41 = scmp.ne.s32.totalorder %s33, %s36
      %p42 = scmp.eq.s32.totalorder %s23, 0
      %p43 = por %p41, %p42
      %p44 = scmp.ne.s32.totalorder %s33, %s36
      %p45 = scmp.eq.s32.totalorder %s28, 1
      %p46 = por %p44, %p45
      %p47 = scmp.ne.s32.totalorder %s36, %s37
      %p48 = scmp.eq.s32.totalorder %s28, 0
      %p49 = por %p47, %p48
      %p50 = scmp.ne.s32.totalorder %s36, %s37
      %p51 = scmp.eq.s32.totalorder %s29, 1
      %p52 = por %p50, %p51
      %p54 = scmp.ne.s32.totalorder %s37, %s53
      %p55 = scmp.eq.s32.totalorder %s29, 0
      %p56 = por %p54, %p55
      %s58 = sadd.s32 %s57, 1
      %p61 = scmp.eq.s32.totalorder %s23, 1
      %p62 = scmp.ne.s32.totalorder %s57, %s59
      %p63 = scmp.eq.s32.totalorder %s23, 0
      %p64 = por %p62, %p63
      %p65 = scmp.ne.s32.totalorder %s57, %s59
      %p66 = scmp.eq.s32.totalorder %s28, 1
      %p67 = por %p65, %p66
      %p68 = scmp.ne.s32.totalorder %s59, %s60
      %p69 = scmp.eq.s32.totalorder %s28, 0
      %p70 = por %p68, %p69
      %p71 = scmp.ne.s32.totalorder %s59, %s60
      %p72 = scmp.eq.s32.totalorder %s29, 1
      %p73 = por %p71, %p72
      %p75 = scmp.ne.s32.totalorder %s60, %s74
      %p76 = scmp.eq.s32.totalorder %s29, 0
      %p77 = por %p75, %p76
      %s79 = sadd.s32 %s78, 1
      %p82 = scmp.eq.s32.totalorder %s23, 1
      %p83 = scmp.ne.s32.totalorder %s78, %s80
      %p84 = scmp.eq.s32.totalorder %s23, 0
      %p85 = por %p83, %p84
      %p86 = scmp.ne.s32.totalorder %s78, %s80
      %p87 = scmp.eq.s32.totalorder %s28, 1
      %p88 = por %p86, %p87
      %p89 = scmp.ne.s32.totalorder %s80, %s81
      %p90 = scmp.eq.s32.totalorder %s28, 0
      %p91 = por %p89, %p90
      %p92 = scmp.ne.s32.totalorder %s80, %s81
      %p93 = scmp.eq.s32.totalorder %s29, 1
      %p94 = por %p92, %p93
      %p96 = scmp.ne.s32.totalorder %s81, %s95
      %p97 = scmp.eq.s32.totalorder %s29, 0
      %p98 = por %p96, %p97
      %s100 = sadd.s32 %s99, 1
      %p103 = scmp.eq.s32.totalorder %s23, 1
      %p104 = scmp.ne.s32.totalorder %s99, %s101
      %p105 = scmp.eq.s32.totalorder %s23, 0
      %p106 = por %p104, %p105
      %p107 = scmp.ne.s32.totalorder %s99, %s101
      %p108 = scmp.eq.s32.totalorder %s28, 1
      %p109 = por %p107, %p108
      %p110 = scmp.ne.s32.totalorder %s101, %s102
      %p111 = scmp.eq.s32.totalorder %s28, 0
      %p112 = por %p110, %p111
      %p113 = scmp.ne.s32.totalorder %s101, %s102
      %p114 = scmp.eq.s32.totalorder %s29, 1
      %p115 = por %p113, %p114
      %p117 = scmp.ne.s32.totalorder %s102, %s116
      %p118 = scmp.eq.s32.totalorder %s29, 0
      %p119 = por %p117, %p118
      %s121 = sadd.s32 %s120, 1
      %p124 = scmp.eq.s32.totalorder %s23, 1
      %p125 = scmp.ne.s32.totalorder %s120, %s122
      %p126 = scmp.eq.s32.totalorder %s23, 0
      %p127 = por %p125, %p126
      %p128 = scmp.ne.s32.totalorder %s120, %s122
      %p129 = scmp.eq.s32.totalorder %s28, 1
      %p130 = por %p128, %p129
      %p131 = scmp.ne.s32.totalorder %s122, %s123
      %p132 = scmp.eq.s32.totalorder %s28, 0
      %p133 = por %p131, %p132
      %p134 = scmp.ne.s32.totalorder %s122, %s123
      %p135 = scmp.eq.s32.totalorder %s29, 1
      %p136 = por %p134, %p135
      %p138 = scmp.ne.s32.totalorder %s123, %s137
      %p139 = scmp.eq.s32.totalorder %s29, 0
      %p140 = por %p138, %p139
      %s142 = sadd.s32 %s141, 1
      %p145 = scmp.eq.s32.totalorder %s23, 1
      %p146 = scmp.ne.s32.totalorder %s141, %s143
      %p147 = scmp.eq.s32.totalorder %s23, 0
      %p148 = por %p146, %p147
      %p149 = scmp.ne.s32.totalorder %s141, %s143
      %p150 = scmp.eq.s32.totalorder %s28, 1
      %p151 = por %p149, %p150
      %p152 = scmp.ne.s32.totalorder %s143, %s144
      %p153 = scmp.eq.s32.totalorder %s28, 0
      %p154 = por %p152, %p153
      %p155 = scmp.ne.s32.totalorder %s143, %s144
      %p156 = scmp.eq.s32.totalorder %s29, 1
      %p157 = por %p155, %p156
      %p159 = scmp.ne.s32.totalorder %s144, %s158
      %p160 = scmp.eq.s32.totalorder %s29, 0
      %p161 = por %p159, %p160
      %s163 = sadd.s32 %s162, 1
      %p166 = scmp.eq.s32.totalorder %s23, 1
      %p167 = scmp.ne.s32.totalorder %s162, %s164
      %p168 = scmp.eq.s32.totalorder %s23, 0
      %p169 = por %p167, %p168
      %p170 = scmp.ne.s32.totalorder %s162, %s164
      %p171 = scmp.eq.s32.totalorder %s28, 1
      %p172 = por %p170, %p171
      %p173 = scmp.ne.s32.totalorder %s164, %s165
      %p174 = scmp.eq.s32.totalorder %s28, 0
      %p175 = por %p173, %p174
      %p176 = scmp.ne.s32.totalorder %s164, %s165
      %p177 = scmp.eq.s32.totalorder %s29, 1
      %p178 = por %p176, %p177
      %p180 = scmp.ne.s32.totalorder %s165, %s179
      %p181 = scmp.eq.s32.totalorder %s29, 0
      %p182 = por %p180, %p181
      %s184 = sadd.s32 %s183, 1
      %p187 = scmp.eq.s32.totalorder %s23, 1
      %p188 = scmp.ne.s32.totalorder %s183, %s185
      %p189 = scmp.eq.s32.totalorder %s23, 0
      %p190 = por %p188, %p189
      %p191 = scmp.ne.s32.totalorder %s183, %s185
      %p192 = scmp.eq.s32.totalorder %s28, 1
      %p193 = por %p191, %p192
      %p194 = scmp.ne.s32.totalorder %s185, %s186
      %p195 = scmp.eq.s32.totalorder %s28, 0
      %p196 = por %p194, %p195
      %p197 = scmp.ne.s32.totalorder %s185, %s186
      %p198 = scmp.eq.s32.totalorder %s29, 1
      %p199 = por %p197, %p198
      %p201 = scmp.ne.s32.totalorder %s186, %s200
      %p202 = scmp.eq.s32.totalorder %s29, 0
      %p203 = por %p201, %p202
      %s205 = sadd.s32 %s204, 1
      %p208 = scmp.eq.s32.totalorder %s23, 1
      %p209 = scmp.ne.s32.totalorder %s204, %s206
      %p210 = scmp.eq.s32.totalorder %s23, 0
      %p211 = por %p209, %p210
      %p212 = scmp.ne.s32.totalorder %s204, %s206
      %p213 = scmp.eq.s32.totalorder %s28, 1
      %p214 = por %p212, %p213
      %p215 = scmp.ne.s32.totalorder %s206, %s207
      %p216 = scmp.eq.s32.totalorder %s28, 0
      %p217 = por %p215, %p216
      %p218 = scmp.ne.s32.totalorder %s206, %s207
      %p219 = scmp.eq.s32.totalorder %s29, 1
      %p220 = por %p218, %p219
      %p222 = scmp.ne.s32.totalorder %s207, %s221
      %p223 = scmp.eq.s32.totalorder %s29, 0
      %p224 = por %p222, %p223
      %s225 = ssub.s32 %s23, %s30
      %p226 = scmp.eq.s32.totalorder %s225, 0
      %s228 = sadd.s32 %s227, 1
      %s229 = scalar_select %p226, %s227, %s228
      %p232 = pneg %p226
      %p233 = scmp.eq.s32.totalorder %s23, 1
      %p234 = por %p232, %p233
      %p235 = scmp.ne.s32.totalorder %s227, %s230
      %p236 = scmp.eq.s32.totalorder %s23, 0
      %p237 = por %p235, %p236
      %p238 = scmp.ne.s32.totalorder %s227, %s230
      %p239 = scmp.eq.s32.totalorder %s28, 1
      %p240 = por %p238, %p239
      %p241 = scmp.ne.s32.totalorder %s230, %s231
      %p242 = scmp.eq.s32.totalorder %s28, 0
      %p243 = por %p241, %p242
      %p244 = scmp.ne.s32.totalorder %s230, %s231
      %p245 = scmp.eq.s32.totalorder %s29, 1
      %p246 = por %p244, %p245
      %p248 = scmp.ne.s32.totalorder %s231, %s247
      %p249 = scmp.eq.s32.totalorder %s29, 0
      %p250 = por %p248, %p249
      %p251 = scmp.le.s32.totalorder 1, %s23
      %p252 = scmp.lt.s32.totalorder %s23, 3
      %p253 = pnand %p251, %p252
      %p254 = pneg %p253
      // Predicated region
      $region9: #{tpu_custom_call.1} parent=5 // pred_check
        _
      $region10: #{tpu_custom_call.1} parent=5 // pred_check_branch
        %256 = sbr.rel (%p253) target = $region12
      $region11: #{tpu_custom_call.1} parent=5 // pred_region
        %s257 = ssub.s32 %s23, 1
        // Predicated region
        $region13: #{tpu_custom_call.1} parent=11 // pred_check
          %p258 = pneg %p70
        $region14: #{tpu_custom_call.1} parent=11 // pred_check_branch
          %260 = sbr.rel (%p258) target = $region16
        $region15: #{tpu_custom_call.1} parent=11 // pred_region
          %s262 = ssub.s32 256, 256
          %263 = vsyncadd [#allocation8], %s262
          %s264 = sshll.u32 [#allocation7], 4
          %s265 = int_to_ptr.vmem [resolvable:$true] %s264
          %270 = dma.hbm_to_vmem [thread:$0]  %s1, 256, %s265, [#allocation8], 64, 64, 4
        $region16: #{tpu_custom_call.1} parent=11 // pred_fallthru
          _
        // Predicated region
        $region17: #{tpu_custom_call.1} parent=11 // pred_check
          %p271 = pneg %p91
        $region18: #{tpu_custom_call.1} parent=11 // pred_check_branch
          %273 = sbr.rel (%p271) target = $region20
        $region19: #{tpu_custom_call.1} parent=11 // pred_region
          _
        $region20: #{tpu_custom_call.1} parent=11 // pred_fallthru
          _
        // Predicated region
        $region21: #{tpu_custom_call.1} parent=11 // pred_check
          %p274 = pneg %p112
        $region22: #{tpu_custom_call.1} parent=11 // pred_check_branch
          %276 = sbr.rel (%p274) target = $region24
        $region23: #{tpu_custom_call.1} parent=11 // pred_region
          _
        $region24: #{tpu_custom_call.1} parent=11 // pred_fallthru
          _
        // Predicated region
        $region25: #{tpu_custom_call.1} parent=11 // pred_check
          %p277 = pneg %p133
        $region26: #{tpu_custom_call.1} parent=11 // pred_check_branch
          %279 = sbr.rel (%p277) target = $region28
        $region27: #{tpu_custom_call.1} parent=11 // pred_region
          %s281 = ssub.s32 512, 512
          %282 = vsyncadd [#allocation8], %s281
          %s283 = sshll.u32 [#allocation9], 4
          %s284 = int_to_ptr.vmem [resolvable:$true] %s283
          %289 = dma.hbm_to_vmem [thread:$0]  %s4, 512, %s284, [#allocation8], 64, 64, 4
        $region28: #{tpu_custom_call.1} parent=11 // pred_fallthru
          _
        // Predicated region
        $region29: #{tpu_custom_call.1} parent=11 // pred_check
          %p290 = pneg %p154
        $region30: #{tpu_custom_call.1} parent=11 // pred_check_branch
          %292 = sbr.rel (%p290) target = $region32
        $region31: #{tpu_custom_call.1} parent=11 // pred_region
          _
        $region32: #{tpu_custom_call.1} parent=11 // pred_fallthru
          _
        // Predicated region
        $region33: #{tpu_custom_call.1} parent=11 // pred_check
          %p293 = pneg %p175
        $region34: #{tpu_custom_call.1} parent=11 // pred_check_branch
          %295 = sbr.rel (%p293) target = $region36
        $region35: #{tpu_custom_call.1} parent=11 // pred_region
          _
        $region36: #{tpu_custom_call.1} parent=11 // pred_fallthru
          _
        // Predicated region
        $region37: #{tpu_custom_call.1} parent=11 // pred_check
          %p296 = pneg %p196
        $region38: #{tpu_custom_call.1} parent=11 // pred_check_branch
          %298 = sbr.rel (%p296) target = $region40
        $region39: #{tpu_custom_call.1} parent=11 // pred_region
          _
        $region40: #{tpu_custom_call.1} parent=11 // pred_fallthru
          _
        // Predicated region
        $region41: #{tpu_custom_call.1} parent=11 // pred_check
          %p299 = pneg %p217
        $region42: #{tpu_custom_call.1} parent=11 // pred_check_branch
          %301 = sbr.rel (%p299) target = $region44
        $region43: #{tpu_custom_call.1} parent=11 // pred_region
          %s303 = ssub.s32 512, 512
          %304 = vsyncadd [#allocation11], %s303
          %s305 = sshll.u32 [#allocation10], 4
          %s306 = int_to_ptr.vmem [resolvable:$true] %s305
          %311 = dma.hbm_to_vmem [thread:$0]  %s8, 512, %s306, [#allocation11], 64, 64, 4
        $region44: #{tpu_custom_call.1} parent=11 // pred_fallthru
          _
      $region12: #{tpu_custom_call.1} parent=5 // pred_fallthru
        _
      %p312 = scmp.lt.s32.totalorder %s23, 2
      // Predicated region
      $region45: #{tpu_custom_call.1} parent=5 // pred_check
        %p313 = pneg %p312
      $region46: #{tpu_custom_call.1} parent=5 // pred_check_branch
        %315 = sbr.rel (%p313) target = $region48
      $region47: #{tpu_custom_call.1} parent=5 // pred_region
        // Predicated region
        $region49: #{tpu_custom_call.1} parent=47 // pred_check
          %p316 = pneg %p43
        $region50: #{tpu_custom_call.1} parent=47 // pred_check_branch
          %318 = sbr.rel (%p316) target = $region52
        $region51: #{tpu_custom_call.1} parent=47 // pred_region
          %s319 = sand.u32 %s33, 1
          %s320 = scalar_lea.sflag [#allocation5], %s319
          %s321 = sand.u32 %s33, 1
          %s322 = smul.addr %s321, 16
          %s323 = scalar_lea.vmem [#allocation4], %s322
          %s325 = ssub.s32 256, 256
          %326 = vsyncadd %s320, %s325
          %s327 = smul.addr %s23, 2
          %s328 = smul.addr %s327, 128
          %s329 = scalar_lea.hbm %s0, %s328
          %s330 = sshll.u32 %s323, 4
          %s331 = int_to_ptr.vmem [resolvable:$true] %s330
          %336 = dma.hbm_to_vmem [thread:$0]  %s329, 256, %s331, %s320, 128, 128, 8
        $region52: #{tpu_custom_call.1} parent=47 // pred_fallthru
          _
      $region48: #{tpu_custom_call.1} parent=5 // pred_fallthru
        _
      %p337 = scmp.le.s32.totalorder 1, %s23
      %p338 = scmp.lt.s32.totalorder %s23, 3
      %p339 = pnand %p337, %p338
      %p340 = pneg %p339
      // Predicated region
      $region53: #{tpu_custom_call.1} parent=5 // pred_check
        _
      $region54: #{tpu_custom_call.1} parent=5 // pred_check_branch
        %342 = sbr.rel (%p339) target = $region56
      $region55: #{tpu_custom_call.1} parent=5 // pred_region
        %s343 = ssub.s32 %s23, 1
        %s344 = sand.u32 %s36, 1
        %s345 = scalar_lea.sflag [#allocation5], %s344
        %s346 = sand.u32 %s36, 1
        %s347 = smul.addr %s346, 16
        %s348 = scalar_lea.vmem [#allocation4], %s347
        // Predicated region
        $region57: #{tpu_custom_call.1} parent=55 // pred_check
          %p349 = pneg %p49
        $region58: #{tpu_custom_call.1} parent=55 // pred_check_branch
          %351 = sbr.rel (%p349) target = $region60
        $region59: #{tpu_custom_call.1} parent=55 // pred_region
          %352 = dma.done %s345, 256
        $region60: #{tpu_custom_call.1} parent=55 // pred_fallthru
          _
        // Predicated region
        $region61: #{tpu_custom_call.1} parent=55 // pred_check
          %p353 = pneg %p70
        $region62: #{tpu_custom_call.1} parent=55 // pred_check_branch
          %355 = sbr.rel (%p353) target = $region64
        $region63: #{tpu_custom_call.1} parent=55 // pred_region
          %356 = dma.done [#allocation8], 256
        $region64: #{tpu_custom_call.1} parent=55 // pred_fallthru
          _
        // Predicated region
        $region65: #{tpu_custom_call.1} parent=55 // pred_check
          %p357 = pneg %p133
        $region66: #{tpu_custom_call.1} parent=55 // pred_check_branch
          %359 = sbr.rel (%p357) target = $region68
        $region67: #{tpu_custom_call.1} parent=55 // pred_region
          %360 = dma.done [#allocation8], 512
        $region68: #{tpu_custom_call.1} parent=55 // pred_fallthru
          _
        // Predicated region
        $region69: #{tpu_custom_call.1} parent=55 // pred_check
          %p361 = pneg %p217
        $region70: #{tpu_custom_call.1} parent=55 // pred_check_branch
          %363 = sbr.rel (%p361) target = $region72
        $region71: #{tpu_custom_call.1} parent=55 // pred_region
          %364 = dma.done [#allocation11], 512
        $region72: #{tpu_custom_call.1} parent=55 // pred_fallthru
          _
        %s365 = sand.u32 %s36, 1
        %s366 = scalar_lea.sflag [#allocation5], %s365
        %s367 = sand.u32 %s36, 1
        %s368 = smul.addr %s367, 16
        %s369 = scalar_lea.vmem [#allocation4], %s368
        %p370 = pneg %p49
        %p371 = pneg %p46
        %p372 = pneg %p70
        %p373 = pneg %p67
        %p374 = pneg %p91
        %p375 = pneg %p88
        %p376 = pneg %p112
        %p377 = pneg %p109
        %p378 = pneg %p133
        %p379 = pneg %p130
        %p380 = pneg %p154
        %p381 = pneg %p151
        %p382 = pneg %p175
        %p383 = pneg %p172
        %p384 = pneg %p196
        %p385 = pneg %p193
        %p386 = pneg %p217
        %p387 = pneg %p214
        %p388 = pneg %p243
        %p389 = pneg %p240
        %s390 = sand.u32 %s230, 1
        %s391 = scalar_lea.sflag [#allocation6], %s390
        %s392 = sand.u32 %s230, 1
        %s393 = smul.addr %s392, 16
        %s394 = scalar_lea.vmem [#allocation12], %s393
        %v396 = vld [vmem:[%s348] sm:$0xff]
        %v397 = vld [vmem:[%s348 + $0x8] sm:$0xff]
        %v398 = vpack.c.bf16 %v397, %v396
        %v399 = vld [vmem:[#allocation7] sm:$0xf]
        %v400 = vld [vmem:[#allocation7 + $0x4] sm:$0xf]
        %v401 = vld [vmem:[#allocation7 + $0x8] sm:$0xf]
        %v402 = vld [vmem:[#allocation7 + $0xc] sm:$0xf]
        %v407 = vunpack.c.l.b16 %v399
        %v408 = vunpack.c.l.b16 %v400
        %v409 = vunpack.c.l.b16 %v401
        %v410 = vunpack.c.l.b16 %v402
        %v411 = vpack.c.b16 %v408, %v407
        %v412 = vpack.c.b16 %v410, %v409
        %vm415 = vcmask 261120
        %v417 = vsel %vm415, %v398, 0
        %419 = vmatprep.subr.bf16.mxu0 0
        %420 = vmatpush1.bf16.msra.mxu0 %v411
        %421 = vmatprep.subr.bf16.mxu0 0
        %422 = vmatpush1.bf16.msra.mxu0 %v412
        %423 = vmatprep.subr.bf16.mxu0 0
        %424 = vmatpush1.bf16.msra.mxu0 0
        %425 = vmatprep.subr.bf16.mxu0 0
        %426 = vmatpush1.bf16.msra.mxu0 0
        %427 = vmatprep.subr.bf16.mxu0 0
        %428 = vmatpush1.bf16.msra.mxu0 0
        %429 = vmatprep.subr.bf16.mxu0 0
        %430 = vmatpush1.bf16.msra.mxu0 0
        %431 = vmatprep.subr.bf16.mxu0 0
        %432 = vmatpush1.bf16.msra.mxu0 0
        %433 = vmatprep.subr.bf16.mxu0 0
        %434 = vmatpush1.bf16.msra.mxu0 0
        %435 = vmatprep.subr.bf16.mxu0 0
        %436 = vmatpush1.bf16.msra.mxu0 0
        %437 = vmatprep.subr.bf16.mxu0 0
        %438 = vmatpush1.bf16.msra.mxu0 0
        %439 = vmatprep.subr.bf16.mxu0 0
        %440 = vmatpush1.bf16.msra.mxu0 0
        %441 = vmatprep.subr.bf16.mxu0 0
        %442 = vmatpush1.bf16.msra.mxu0 0
        %443 = vmatprep.subr.bf16.mxu0 0
        %444 = vmatpush1.bf16.msra.mxu0 0
        %445 = vmatprep.subr.bf16.mxu0 0
        %446 = vmatpush1.bf16.msra.mxu0 0
        %447 = vmatprep.subr.bf16.mxu0 0
        %448 = vmatpush1.bf16.msra.mxu0 0
        %449 = vmatprep.subr.bf16.mxu0 0
        %450 = vmatpush1.bf16.msra.mxu0 0
        %451 = vmatprep.mubr.bf16.mxu0 0
        %452 = vmatmul.mubr.bf16.gmra.mrb[0].mxu0 %v417
        %v453 = vpop.f32.mrb[0].mxu0
        %v454 = vadd.f32 0.0, %v453
        %v455 = vpop.f32.mrb[0].mxu0
        %v456 = vpop.f32.mrb[0].mxu0
        %v457 = vadd.f32 0.0, %v456
        %v458 = vpop.f32.mrb[0].mxu0
        %459 = vdwg.mxu0
        %v460 = vld [vmem:[%s2 + $0x3] sm:$0x1]
        %v461 = vlaneseq
        %v462 = vshrl.u32 %v461, 7
        %v463 = vsub.s32 0, %v462
        %v464 = vrot.slane %v460, %v463
        %v465 = vmul.f32 %v454, %v464
        %v466 = vmul.f32 %v457, %v464
        %v467 = vld [vmem:[%s2] sm:$0x1]
        %v468 = vlaneseq
        %v469 = vshrl.u32 %v468, 7
        %v470 = vsub.s32 0, %v469
        %v471 = vrot.slane %v467, %v470
        %v472 = vmul.f32 %v471, 0.0
        %v473 = vmul.f32 %v454, %v471
        %v474 = vmul.f32 %v457, %v471
        %vm478 = vcmask 1042432
        %v479 = vrot.slane %v472, 5
        %v480 = vrot.slane %v473, 5
        %v481 = vsel %vm478, %v479, %v480
        %v482 = vrot.slane %v474, 5
        %v483 = vsel %vm478, %v480, %v482
        %v486 = vadd.f32 %v465, %v481
        %v487 = vadd.f32 %v466, %v483
        %v488 = vld [vmem:[%s2 + $0x1] sm:$0x1]
        %v489 = vlaneseq
        %v490 = vshrl.u32 %v489, 7
        %v491 = vsub.s32 0, %v490
        %v492 = vrot.slane %v488, %v491
        %v493 = vmul.f32 %v492, 0.0
        %v494 = vmul.f32 %v454, %v492
        %v495 = vmul.f32 %v457, %v492
        %vm499 = vcmask 1041408
        %v500 = vrot.slane %v493, 6
        %v501 = vrot.slane %v494, 6
        %v502 = vsel %vm499, %v500, %v501
        %v503 = vrot.slane %v495, 6
        %v504 = vsel %vm499, %v501, %v503
        %v507 = vadd.f32 %v486, %v502
        %v508 = vadd.f32 %v487, %v504
        %v509 = vld [vmem:[%s2 + $0x2] sm:$0x1]
        %v510 = vlaneseq
        %v511 = vshrl.u32 %v510, 7
        %v512 = vsub.s32 0, %v511
        %v513 = vrot.slane %v509, %v512
        %v514 = vmul.f32 %v513, 0.0
        %v515 = vmul.f32 %v454, %v513
        %v516 = vmul.f32 %v457, %v513
        %vm520 = vcmask 1040384
        %v521 = vrot.slane %v514, 7
        %v522 = vrot.slane %v515, 7
        %v523 = vsel %vm520, %v521, %v522
        %v524 = vrot.slane %v516, 7
        %v525 = vsel %vm520, %v522, %v524
        %v528 = vadd.f32 %v507, %v523
        %v529 = vadd.f32 %v508, %v525
        %v530 = vld [vmem:[%s3] sm:$0x1]
        %v532 = vlaneseq
        %v533 = vshrl.u32 %v532, 7
        %v534 = vsub.s32 0, %v533
        %v535 = vrot.slane %v530, %v534
        %v537 = vadd.f32 %v528, %v535
        %v538 = vadd.f32 %v529, %v535
        %v539 = vsub.f32 0.0, %v537
        %v540 = vsub.f32 0.0, %v538
        %v541 = vmul.f32 %v539, 1.442695
        %v542 = vpow.pop %v541
        %v543 = vmul.f32 %v540, 1.442695
        %v544 = vpow.pop %v543
        %v545 = vadd.f32 %v542, 1.0
        %v546 = vadd.f32 %v544, 1.0
        %v547 = vrcp.pop %v545
        %v548 = vmul.f32 1.0, %v547
        %v549 = vrcp.pop %v546
        %v550 = vmul.f32 1.0, %v549
        %v551 = vmul.f32 %v537, %v548
        %v552 = vmul.f32 %v538, %v550
        %v553 = vpack.c.bf16 %v552, %v551
        %v554 = vld [vmem:[#allocation9] sm:$0xf]
        %v555 = vld [vmem:[#allocation9 + $0x4] sm:$0xf]
        %v556 = vld [vmem:[#allocation9 + $0x8] sm:$0xf]
        %v557 = vld [vmem:[#allocation9 + $0xc] sm:$0xf]
        %v558 = vld [vmem:[#allocation9 + $0x10] sm:$0xf]
        %v559 = vld [vmem:[#allocation9 + $0x14] sm:$0xf]
        %v560 = vld [vmem:[#allocation9 + $0x18] sm:$0xf]
        %v561 = vld [vmem:[#allocation9 + $0x1c] sm:$0xf]
        %v570 = vunpack.c.l.b16 %v554
        %v571 = vunpack.c.l.b16 %v555
        %v572 = vunpack.c.l.b16 %v556
        %v573 = vunpack.c.l.b16 %v557
        %v574 = vunpack.c.l.b16 %v558
        %v575 = vunpack.c.l.b16 %v559
        %v576 = vunpack.c.l.b16 %v560
        %v577 = vunpack.c.l.b16 %v561
        %v578 = vpack.c.b16 %v571, %v570
        %v579 = vpack.c.b16 %v573, %v572
        %v580 = vpack.c.b16 %v575, %v574
        %v581 = vpack.c.b16 %v577, %v576
        %vm586 = vcmask 523264
        %v588 = vsel %vm586, %v553, 0
        %590 = vmatprep.subr.bf16.mxu0 0
        %591 = vmatpush1.bf16.msra.mxu0 %v578
        %592 = vmatprep.subr.bf16.mxu0 0
        %593 = vmatpush1.bf16.msra.mxu0 %v579
        %594 = vmatprep.subr.bf16.mxu0 0
        %595 = vmatpush1.bf16.msra.mxu0 %v580
        %596 = vmatprep.subr.bf16.mxu0 0
        %597 = vmatpush1.bf16.msra.mxu0 %v581
        %598 = vmatprep.subr.bf16.mxu0 0
        %599 = vmatpush1.bf16.msra.mxu0 0
        %600 = vmatprep.subr.bf16.mxu0 0
        %601 = vmatpush1.bf16.msra.mxu0 0
        %602 = vmatprep.subr.bf16.mxu0 0
        %603 = vmatpush1.bf16.msra.mxu0 0
        %604 = vmatprep.subr.bf16.mxu0 0
        %605 = vmatpush1.bf16.msra.mxu0 0
        %606 = vmatprep.subr.bf16.mxu0 0
        %607 = vmatpush1.bf16.msra.mxu0 0
        %608 = vmatprep.subr.bf16.mxu0 0
        %609 = vmatpush1.bf16.msra.mxu0 0
        %610 = vmatprep.subr.bf16.mxu0 0
        %611 = vmatpush1.bf16.msra.mxu0 0
        %612 = vmatprep.subr.bf16.mxu0 0
        %613 = vmatpush1.bf16.msra.mxu0 0
        %614 = vmatprep.subr.bf16.mxu0 0
        %615 = vmatpush1.bf16.msra.mxu0 0
        %616 = vmatprep.subr.bf16.mxu0 0
        %617 = vmatpush1.bf16.msra.mxu0 0
        %618 = vmatprep.subr.bf16.mxu0 0
        %619 = vmatpush1.bf16.msra.mxu0 0
        %620 = vmatprep.subr.bf16.mxu0 0
        %621 = vmatpush1.bf16.msra.mxu0 0
        %622 = vmatprep.mubr.bf16.mxu0 0
        %623 = vmatmul.mubr.bf16.gmra.mrb[0].mxu0 %v588
        %v624 = vpop.f32.mrb[0].mxu0
        %v625 = vadd.f32 0.0, %v624
        %v626 = vpop.f32.mrb[0].mxu0
        %v627 = vpop.f32.mrb[0].mxu0
        %v628 = vadd.f32 0.0, %v627
        %v629 = vpop.f32.mrb[0].mxu0
        %630 = vdwg.mxu0
        %v631 = vld [vmem:[%s5] sm:$0x1]
        %v633 = vlaneseq
        %v634 = vshrl.u32 %v633, 7
        %v635 = vsub.s32 0, %v634
        %v636 = vrot.slane %v631, %v635
        %v638 = vadd.f32 %v625, %v636
        %v639 = vadd.f32 %v628, %v636
        %v640 = vmax.f32 %v638, 0.0
        %v641 = vmax.f32 %v639, 0.0
        %v642 = vand.u32 2147483647, %v638
        %v643 = vand.u32 2147483647, %v639
        %v644 = vsub.f32 0.0, %v642
        %v645 = vsub.f32 0.0, %v643
        %v646 = vmul.f32 %v644, 1.442695
        %v647 = vpow.pop %v646
        %v648 = vmul.f32 %v645, 1.442695
        %v649 = vpow.pop %v648
        %v650 = vadd.f32 %v647, 1.0
        %v651 = vadd.f32 %v649, 1.0
        %v652 = vlog2.pop %v650
        %v653 = vmul.f32 %v652, 0.6931472
        %v654 = vlog2.pop %v651
        %v655 = vmul.f32 %v654, 0.6931472
        %v656 = vadd.f32 %v640, %v653
        %v657 = vadd.f32 %v641, %v655
        %v658 = vmul.f32 %v656, %v551
        %v659 = vmul.f32 %v657, %v552
        %v660 = vld [vmem:[%s6] sm:$0xff]
        %v661 = vld [vmem:[%s6 + $0x8] sm:$0xff]
        %v662 = vsub.f32 0.0, %v454
        %v663 = vsub.f32 0.0, %v457
        %v664 = vmul.f32 %v662, 1.442695
        %v665 = vpow.pop %v664
        %v666 = vmul.f32 %v663, 1.442695
        %v667 = vpow.pop %v666
        %v668 = vadd.f32 %v665, 1.0
        %v669 = vadd.f32 %v667, 1.0
        %v670 = vrcp.pop %v668
        %v671 = vmul.f32 1.0, %v670
        %v672 = vrcp.pop %v669
        %v673 = vmul.f32 1.0, %v672
        %v674 = vmul.f32 %v454, %v671
        %v675 = vmul.f32 %v457, %v673
        %v678 = vcombine.high %v656, %v656
        %v680 = vunpack.c.l.s4 1966171168
        %v681 = vunpack.c.0.s8 %v680
        %v682 = vlaneseq
        %v683 = vshrl.u32 %v682, 7
        %v684 = vsub.s32 %v681, %v683
        %v685 = vrot.slane %v656, %v684
        %v687 = vunpack.c.l.s4 1966171168
        %v688 = vunpack.c.0.s8 %v687
        %v689 = vlaneseq
        %v690 = vshrl.u32 %v689, 7
        %v691 = vsub.s32 %v688, %v690
        %v692 = vrot.slane %v678, %v691
        %v693 = vcombine.high %v685, %v685
        %v694 = vcombine.high %v692, %v692
        %v696 = vunpack.c.l.s4 1966171168
        %v697 = vunpack.c.0.s8 %v696
        %v698 = vlaneseq
        %v699 = vshrl.u32 %v698, 7
        %v700 = vsub.s32 %v697, %v699
        %v701 = vrot.slane %v685, %v700
        %v703 = vunpack.c.l.s4 1966171168
        %v704 = vunpack.c.0.s8 %v703
        %v705 = vlaneseq
        %v706 = vshrl.u32 %v705, 7
        %v707 = vsub.s32 %v704, %v706
        %v708 = vrot.slane %v692, %v707
        %v710 = vunpack.c.l.s4 1966171168
        %v711 = vunpack.c.0.s8 %v710
        %v712 = vlaneseq
        %v713 = vshrl.u32 %v712, 7
        %v714 = vsub.s32 %v711, %v713
        %v715 = vrot.slane %v693, %v714
        %v717 = vunpack.c.l.s4 1966171168
        %v718 = vunpack.c.0.s8 %v717
        %v719 = vlaneseq
        %v720 = vshrl.u32 %v719, 7
        %v721 = vsub.s32 %v718, %v720
        %v722 = vrot.slane %v694, %v721
        %v723 = vcombine.high %v701, %v701
        %v724 = vcombine.high %v708, %v708
        %v725 = vcombine.high %v715, %v715
        %v726 = vcombine.high %v722, %v722
        %v727 = vcombine.high %v657, %v657
        %v729 = vunpack.c.l.s4 1966171168
        %v730 = vunpack.c.0.s8 %v729
        %v731 = vlaneseq
        %v732 = vshrl.u32 %v731, 7
        %v733 = vsub.s32 %v730, %v732
        %v734 = vrot.slane %v657, %v733
        %v736 = vunpack.c.l.s4 1966171168
        %v737 = vunpack.c.0.s8 %v736
        %v738 = vlaneseq
        %v739 = vshrl.u32 %v738, 7
        %v740 = vsub.s32 %v737, %v739
        %v741 = vrot.slane %v727, %v740
        %v742 = vcombine.high %v734, %v734
        %v743 = vcombine.high %v741, %v741
        %v745 = vunpack.c.l.s4 1966171168
        %v746 = vunpack.c.0.s8 %v745
        %v747 = vlaneseq
        %v748 = vshrl.u32 %v747, 7
        %v749 = vsub.s32 %v746, %v748
        %v750 = vrot.slane %v734, %v749
        %v752 = vunpack.c.l.s4 1966171168
        %v753 = vunpack.c.0.s8 %v752
        %v754 = vlaneseq
        %v755 = vshrl.u32 %v754, 7
        %v756 = vsub.s32 %v753, %v755
        %v757 = vrot.slane %v741, %v756
        %v759 = vunpack.c.l.s4 1966171168
        %v760 = vunpack.c.0.s8 %v759
        %v761 = vlaneseq
        %v762 = vshrl.u32 %v761, 7
        %v763 = vsub.s32 %v760, %v762
        %v764 = vrot.slane %v742, %v763
        %v766 = vunpack.c.l.s4 1966171168
        %v767 = vunpack.c.0.s8 %v766
        %v768 = vlaneseq
        %v769 = vshrl.u32 %v768, 7
        %v770 = vsub.s32 %v767, %v769
        %v771 = vrot.slane %v743, %v770
        %v772 = vcombine.high %v750, %v750
        %v773 = vcombine.high %v757, %v757
        %v774 = vcombine.high %v764, %v764
        %v775 = vcombine.high %v771, %v771
        %v776 = vlaneseq
        %v777 = vshrl.u32 %v776, 7
        %v778 = vsub.s32 0, %v777
        %v779 = vrot.slane %v701, %v778
        %v780 = vlaneseq
        %v781 = vshrl.u32 %v780, 7
        %v782 = vsub.s32 0, %v781
        %v783 = vrot.slane %v715, %v782
        %v784 = vlaneseq
        %v785 = vshrl.u32 %v784, 7
        %v786 = vsub.s32 0, %v785
        %v787 = vrot.slane %v723, %v786
        %v788 = vlaneseq
        %v789 = vshrl.u32 %v788, 7
        %v790 = vsub.s32 0, %v789
        %v791 = vrot.slane %v725, %v790
        %v792 = vlaneseq
        %v793 = vshrl.u32 %v792, 7
        %v794 = vsub.s32 0, %v793
        %v795 = vrot.slane %v708, %v794
        %v796 = vlaneseq
        %v797 = vshrl.u32 %v796, 7
        %v798 = vsub.s32 0, %v797
        %v799 = vrot.slane %v722, %v798
        %v800 = vlaneseq
        %v801 = vshrl.u32 %v800, 7
        %v802 = vsub.s32 0, %v801
        %v803 = vrot.slane %v724, %v802
        %v804 = vlaneseq
        %v805 = vshrl.u32 %v804, 7
        %v806 = vsub.s32 0, %v805
        %v807 = vrot.slane %v726, %v806
        %v808 = vlaneseq
        %v809 = vshrl.u32 %v808, 7
        %v810 = vsub.s32 0, %v809
        %v811 = vrot.slane %v750, %v810
        %v812 = vlaneseq
        %v813 = vshrl.u32 %v812, 7
        %v814 = vsub.s32 0, %v813
        %v815 = vrot.slane %v764, %v814
        %v816 = vlaneseq
        %v817 = vshrl.u32 %v816, 7
        %v818 = vsub.s32 0, %v817
        %v819 = vrot.slane %v772, %v818
        %v820 = vlaneseq
        %v821 = vshrl.u32 %v820, 7
        %v822 = vsub.s32 0, %v821
        %v823 = vrot.slane %v774, %v822
        %v824 = vlaneseq
        %v825 = vshrl.u32 %v824, 7
        %v826 = vsub.s32 0, %v825
        %v827 = vrot.slane %v757, %v826
        %v828 = vlaneseq
        %v829 = vshrl.u32 %v828, 7
        %v830 = vsub.s32 0, %v829
        %v831 = vrot.slane %v771, %v830
        %v832 = vlaneseq
        %v833 = vshrl.u32 %v832, 7
        %v834 = vsub.s32 0, %v833
        %v835 = vrot.slane %v773, %v834
        %v836 = vlaneseq
        %v837 = vshrl.u32 %v836, 7
        %v838 = vsub.s32 0, %v837
        %v839 = vrot.slane %v775, %v838
        %v856 = vmul.f32 %v779, %v660
        %v857 = vmul.f32 %v779, %v661
        %v858 = vmul.f32 %v783, %v660
        %v859 = vmul.f32 %v783, %v661
        %v860 = vmul.f32 %v787, %v660
        %v861 = vmul.f32 %v787, %v661
        %v862 = vmul.f32 %v791, %v660
        %v863 = vmul.f32 %v791, %v661
        %v864 = vmul.f32 %v795, %v660
        %v865 = vmul.f32 %v795, %v661
        %v866 = vmul.f32 %v799, %v660
        %v867 = vmul.f32 %v799, %v661
        %v868 = vmul.f32 %v803, %v660
        %v869 = vmul.f32 %v803, %v661
        %v870 = vmul.f32 %v807, %v660
        %v871 = vmul.f32 %v807, %v661
        %v872 = vmul.f32 %v811, %v660
        %v873 = vmul.f32 %v811, %v661
        %v874 = vmul.f32 %v815, %v660
        %v875 = vmul.f32 %v815, %v661
        %v876 = vmul.f32 %v819, %v660
        %v877 = vmul.f32 %v819, %v661
        %v878 = vmul.f32 %v823, %v660
        %v879 = vmul.f32 %v823, %v661
        %v880 = vmul.f32 %v827, %v660
        %v881 = vmul.f32 %v827, %v661
        %v882 = vmul.f32 %v831, %v660
        %v883 = vmul.f32 %v831, %v661
        %v884 = vmul.f32 %v835, %v660
        %v885 = vmul.f32 %v835, %v661
        %v886 = vmul.f32 %v839, %v660
        %v887 = vmul.f32 %v839, %v661
        %v888 = vmul.f32 %v856, 1.442695
        %v889 = vpow.pop %v888
        %v890 = vmul.f32 %v857, 1.442695
        %v891 = vpow.pop %v890
        %v892 = vmul.f32 %v858, 1.442695
        %v893 = vpow.pop %v892
        %v894 = vmul.f32 %v859, 1.442695
        %v895 = vpow.pop %v894
        %v896 = vmul.f32 %v860, 1.442695
        %v897 = vpow.pop %v896
        %v898 = vmul.f32 %v861, 1.442695
        %v899 = vpow.pop %v898
        %v900 = vmul.f32 %v862, 1.442695
        %v901 = vpow.pop %v900
        %v902 = vmul.f32 %v863, 1.442695
        %v903 = vpow.pop %v902
        %v904 = vmul.f32 %v864, 1.442695
        %v905 = vpow.pop %v904
        %v906 = vmul.f32 %v865, 1.442695
        %v907 = vpow.pop %v906
        %v908 = vmul.f32 %v866, 1.442695
        %v909 = vpow.pop %v908
        %v910 = vmul.f32 %v867, 1.442695
        %v911 = vpow.pop %v910
        %v912 = vmul.f32 %v868, 1.442695
        %v913 = vpow.pop %v912
        %v914 = vmul.f32 %v869, 1.442695
        %v915 = vpow.pop %v914
        %v916 = vmul.f32 %v870, 1.442695
        %v917 = vpow.pop %v916
        %v918 = vmul.f32 %v871, 1.442695
        %v919 = vpow.pop %v918
        %v920 = vmul.f32 %v872, 1.442695
        %v921 = vpow.pop %v920
        %v922 = vmul.f32 %v873, 1.442695
        %v923 = vpow.pop %v922
        %v924 = vmul.f32 %v874, 1.442695
        %v925 = vpow.pop %v924
        %v926 = vmul.f32 %v875, 1.442695
        %v927 = vpow.pop %v926
        %v928 = vmul.f32 %v876, 1.442695
        %v929 = vpow.pop %v928
        %v930 = vmul.f32 %v877, 1.442695
        %v931 = vpow.pop %v930
        %v932 = vmul.f32 %v878, 1.442695
        %v933 = vpow.pop %v932
        %v934 = vmul.f32 %v879, 1.442695
        %v935 = vpow.pop %v934
        %v936 = vmul.f32 %v880, 1.442695
        %v937 = vpow.pop %v936
        %v938 = vmul.f32 %v881, 1.442695
        %v939 = vpow.pop %v938
        %v940 = vmul.f32 %v882, 1.442695
        %v941 = vpow.pop %v940
        %v942 = vmul.f32 %v883, 1.442695
        %v943 = vpow.pop %v942
        %v944 = vmul.f32 %v884, 1.442695
        %v945 = vpow.pop %v944
        %v946 = vmul.f32 %v885, 1.442695
        %v947 = vpow.pop %v946
        %v948 = vmul.f32 %v886, 1.442695
        %v949 = vpow.pop %v948
        %v950 = vmul.f32 %v887, 1.442695
        %v951 = vpow.pop %v950
        %952 = vst.msk [vmem:[#allocation2] sm:$0xff] %vm586, %v889
        %953 = vst.msk [vmem:[#allocation2 + $0x8] sm:$0xff] %vm586, %v891
        %954 = vst.msk [vmem:[#allocation2 + $0x10] sm:$0xff] %vm586, %v893
        %955 = vst.msk [vmem:[#allocation2 + $0x18] sm:$0xff] %vm586, %v895
        %956 = vst.msk [vmem:[#allocation2 + $0x20] sm:$0xff] %vm586, %v897
        %957 = vst.msk [vmem:[#allocation2 + $0x28] sm:$0xff] %vm586, %v899
        %958 = vst.msk [vmem:[#allocation2 + $0x30] sm:$0xff] %vm586, %v901
        %959 = vst.msk [vmem:[#allocation2 + $0x38] sm:$0xff] %vm586, %v903
        %960 = vst.msk [vmem:[#allocation2 + $0x40] sm:$0xff] %vm586, %v905
        %961 = vst.msk [vmem:[#allocation2 + $0x48] sm:$0xff] %vm586, %v907
        %962 = vst.msk [vmem:[#allocation2 + $0x50] sm:$0xff] %vm586, %v909
        %963 = vst.msk [vmem:[#allocation2 + $0x58] sm:$0xff] %vm586, %v911
        %964 = vst.msk [vmem:[#allocation2 + $0x60] sm:$0xff] %vm586, %v913
        %965 = vst.msk [vmem:[#allocation2 + $0x68] sm:$0xff] %vm586, %v915
        %966 = vst.msk [vmem:[#allocation2 + $0x70] sm:$0xff] %vm586, %v917
        %967 = vst.msk [vmem:[#allocation2 + $0x78] sm:$0xff] %vm586, %v919
        %968 = vst.msk [vmem:[#allocation2 + $0x80] sm:$0xff] %vm586, %v921
        %969 = vst.msk [vmem:[#allocation2 + $0x88] sm:$0xff] %vm586, %v923
        %970 = vst.msk [vmem:[#allocation2 + $0x90] sm:$0xff] %vm586, %v925
        %971 = vst.msk [vmem:[#allocation2 + $0x98] sm:$0xff] %vm586, %v927
        %972 = vst.msk [vmem:[#allocation2 + $0xa0] sm:$0xff] %vm586, %v929
        %973 = vst.msk [vmem:[#allocation2 + $0xa8] sm:$0xff] %vm586, %v931
        %974 = vst.msk [vmem:[#allocation2 + $0xb0] sm:$0xff] %vm586, %v933
        %975 = vst.msk [vmem:[#allocation2 + $0xb8] sm:$0xff] %vm586, %v935
        %976 = vst.msk [vmem:[#allocation2 + $0xc0] sm:$0xff] %vm586, %v937
        %977 = vst.msk [vmem:[#allocation2 + $0xc8] sm:$0xff] %vm586, %v939
        %978 = vst.msk [vmem:[#allocation2 + $0xd0] sm:$0xff] %vm586, %v941
        %979 = vst.msk [vmem:[#allocation2 + $0xd8] sm:$0xff] %vm586, %v943
        %980 = vst.msk [vmem:[#allocation2 + $0xe0] sm:$0xff] %vm586, %v945
        %981 = vst.msk [vmem:[#allocation2 + $0xe8] sm:$0xff] %vm586, %v947
        %982 = vst.msk [vmem:[#allocation2 + $0xf0] sm:$0xff] %vm586, %v949
        %983 = vst.msk [vmem:[#allocation2 + $0xf8] sm:$0xff] %vm586, %v951
        %v986 = vcombine.high %v658, %v658
        %v988 = vunpack.c.l.s4 1966171168
        %v989 = vunpack.c.0.s8 %v988
        %v990 = vlaneseq
        %v991 = vshrl.u32 %v990, 7
        %v992 = vsub.s32 %v989, %v991
        %v993 = vrot.slane %v658, %v992
        %v995 = vunpack.c.l.s4 1966171168
        %v996 = vunpack.c.0.s8 %v995
        %v997 = vlaneseq
        %v998 = vshrl.u32 %v997, 7
        %v999 = vsub.s32 %v996, %v998
        %v1000 = vrot.slane %v986, %v999
        %v1001 = vcombine.high %v993, %v993
        %v1002 = vcombine.high %v1000, %v1000
        %v1004 = vunpack.c.l.s4 1966171168
        %v1005 = vunpack.c.0.s8 %v1004
        %v1006 = vlaneseq
        %v1007 = vshrl.u32 %v1006, 7
        %v1008 = vsub.s32 %v1005, %v1007
        %v1009 = vrot.slane %v993, %v1008
        %v1011 = vunpack.c.l.s4 1966171168
        %v1012 = vunpack.c.0.s8 %v1011
        %v1013 = vlaneseq
        %v1014 = vshrl.u32 %v1013, 7
        %v1015 = vsub.s32 %v1012, %v1014
        %v1016 = vrot.slane %v1000, %v1015
        %v1018 = vunpack.c.l.s4 1966171168
        %v1019 = vunpack.c.0.s8 %v1018
        %v1020 = vlaneseq
        %v1021 = vshrl.u32 %v1020, 7
        %v1022 = vsub.s32 %v1019, %v1021
        %v1023 = vrot.slane %v1001, %v1022
        %v1025 = vunpack.c.l.s4 1966171168
        %v1026 = vunpack.c.0.s8 %v1025
        %v1027 = vlaneseq
        %v1028 = vshrl.u32 %v1027, 7
        %v1029 = vsub.s32 %v1026, %v1028
        %v1030 = vrot.slane %v1002, %v1029
        %v1031 = vcombine.high %v1009, %v1009
        %v1032 = vcombine.high %v1016, %v1016
        %v1033 = vcombine.high %v1023, %v1023
        %v1034 = vcombine.high %v1030, %v1030
        %v1035 = vcombine.high %v659, %v659
        %v1037 = vunpack.c.l.s4 1966171168
        %v1038 = vunpack.c.0.s8 %v1037
        %v1039 = vlaneseq
        %v1040 = vshrl.u32 %v1039, 7
        %v1041 = vsub.s32 %v1038, %v1040
        %v1042 = vrot.slane %v659, %v1041
        %v1044 = vunpack.c.l.s4 1966171168
        %v1045 = vunpack.c.0.s8 %v1044
        %v1046 = vlaneseq
        %v1047 = vshrl.u32 %v1046, 7
        %v1048 = vsub.s32 %v1045, %v1047
        %v1049 = vrot.slane %v1035, %v1048
        %v1050 = vcombine.high %v1042, %v1042
        %v1051 = vcombine.high %v1049, %v1049
        %v1053 = vunpack.c.l.s4 1966171168
        %v1054 = vunpack.c.0.s8 %v1053
        %v1055 = vlaneseq
        %v1056 = vshrl.u32 %v1055, 7
        %v1057 = vsub.s32 %v1054, %v1056
        %v1058 = vrot.slane %v1042, %v1057
        %v1060 = vunpack.c.l.s4 1966171168
        %v1061 = vunpack.c.0.s8 %v1060
        %v1062 = vlaneseq
        %v1063 = vshrl.u32 %v1062, 7
        %v1064 = vsub.s32 %v1061, %v1063
        %v1065 = vrot.slane %v1049, %v1064
        %v1067 = vunpack.c.l.s4 1966171168
        %v1068 = vunpack.c.0.s8 %v1067
        %v1069 = vlaneseq
        %v1070 = vshrl.u32 %v1069, 7
        %v1071 = vsub.s32 %v1068, %v1070
        %v1072 = vrot.slane %v1050, %v1071
        %v1074 = vunpack.c.l.s4 1966171168
        %v1075 = vunpack.c.0.s8 %v1074
        %v1076 = vlaneseq
        %v1077 = vshrl.u32 %v1076, 7
        %v1078 = vsub.s32 %v1075, %v1077
        %v1079 = vrot.slane %v1051, %v1078
        %v1080 = vcombine.high %v1058, %v1058
        %v1081 = vcombine.high %v1065, %v1065
        %v1082 = vcombine.high %v1072, %v1072
        %v1083 = vcombine.high %v1079, %v1079
        %v1084 = vlaneseq
        %v1085 = vshrl.u32 %v1084, 7
        %v1086 = vsub.s32 0, %v1085
        %v1087 = vrot.slane %v625, %v1086
        %s1089 = sor.u32 256, 64
        %1090 = vbcast.lane.b32.xlu0 %v1087, %s1089
        %v1091 = vpop.permute.xlu0 %1090
        %s1093 = sor.u32 256, 72
        %1094 = vbcast.lane.b32.xlu0 %v1087, %s1093
        %v1095 = vpop.permute.xlu0 %1094
        %v1096 = vlaneseq
        %v1097 = vshrl.u32 %v1096, 7
        %v1098 = vsub.s32 1, %v1097
        %v1099 = vrot.slane %v625, %v1098
        %s1101 = sor.u32 256, 64
        %1102 = vbcast.lane.b32.xlu0 %v1099, %s1101
        %v1103 = vpop.permute.xlu0 %1102
        %s1105 = sor.u32 256, 72
        %1106 = vbcast.lane.b32.xlu0 %v1099, %s1105
        %v1107 = vpop.permute.xlu0 %1106
        %v1108 = vlaneseq
        %v1109 = vshrl.u32 %v1108, 7
        %v1110 = vsub.s32 2, %v1109
        %v1111 = vrot.slane %v625, %v1110
        %s1113 = sor.u32 256, 64
        %1114 = vbcast.lane.b32.xlu0 %v1111, %s1113
        %v1115 = vpop.permute.xlu0 %1114
        %s1117 = sor.u32 256, 72
        %1118 = vbcast.lane.b32.xlu0 %v1111, %s1117
        %v1119 = vpop.permute.xlu0 %1118
        %v1120 = vlaneseq
        %v1121 = vshrl.u32 %v1120, 7
        %v1122 = vsub.s32 3, %v1121
        %v1123 = vrot.slane %v625, %v1122
        %s1125 = sor.u32 256, 64
        %1126 = vbcast.lane.b32.xlu0 %v1123, %s1125
        %v1127 = vpop.permute.xlu0 %1126
        %s1129 = sor.u32 256, 72
        %1130 = vbcast.lane.b32.xlu0 %v1123, %s1129
        %v1131 = vpop.permute.xlu0 %1130
        %v1132 = vlaneseq
        %v1133 = vshrl.u32 %v1132, 7
        %v1134 = vsub.s32 4, %v1133
        %v1135 = vrot.slane %v625, %v1134
        %s1137 = sor.u32 256, 64
        %1138 = vbcast.lane.b32.xlu0 %v1135, %s1137
        %v1139 = vpop.permute.xlu0 %1138
        %s1141 = sor.u32 256, 72
        %1142 = vbcast.lane.b32.xlu0 %v1135, %s1141
        %v1143 = vpop.permute.xlu0 %1142
        %v1144 = vlaneseq
        %v1145 = vshrl.u32 %v1144, 7
        %v1146 = vsub.s32 5, %v1145
        %v1147 = vrot.slane %v625, %v1146
        %s1149 = sor.u32 256, 64
        %1150 = vbcast.lane.b32.xlu0 %v1147, %s1149
        %v1151 = vpop.permute.xlu0 %1150
        %s1153 = sor.u32 256, 72
        %1154 = vbcast.lane.b32.xlu0 %v1147, %s1153
        %v1155 = vpop.permute.xlu0 %1154
        %v1156 = vlaneseq
        %v1157 = vshrl.u32 %v1156, 7
        %v1158 = vsub.s32 6, %v1157
        %v1159 = vrot.slane %v625, %v1158
        %s1161 = sor.u32 256, 64
        %1162 = vbcast.lane.b32.xlu0 %v1159, %s1161
        %v1163 = vpop.permute.xlu0 %1162
        %s1165 = sor.u32 256, 72
        %1166 = vbcast.lane.b32.xlu0 %v1159, %s1165
        %v1167 = vpop.permute.xlu0 %1166
        %v1168 = vlaneseq
        %v1169 = vshrl.u32 %v1168, 7
        %v1170 = vsub.s32 7, %v1169
        %v1171 = vrot.slane %v625, %v1170
        %s1173 = sor.u32 256, 64
        %1174 = vbcast.lane.b32.xlu0 %v1171, %s1173
        %v1175 = vpop.permute.xlu0 %1174
        %s1177 = sor.u32 256, 72
        %1178 = vbcast.lane.b32.xlu0 %v1171, %s1177
        %v1179 = vpop.permute.xlu0 %1178
        %v1180 = vlaneseq
        %v1181 = vshrl.u32 %v1180, 7
        %v1182 = vsub.s32 0, %v1181
        %v1183 = vrot.slane %v628, %v1182
        %s1185 = sor.u32 256, 64
        %1186 = vbcast.lane.b32.xlu0 %v1183, %s1185
        %v1187 = vpop.permute.xlu0 %1186
        %s1189 = sor.u32 256, 72
        %1190 = vbcast.lane.b32.xlu0 %v1183, %s1189
        %v1191 = vpop.permute.xlu0 %1190
        %v1192 = vlaneseq
        %v1193 = vshrl.u32 %v1192, 7
        %v1194 = vsub.s32 1, %v1193
        %v1195 = vrot.slane %v628, %v1194
        %s1197 = sor.u32 256, 64
        %1198 = vbcast.lane.b32.xlu0 %v1195, %s1197
        %v1199 = vpop.permute.xlu0 %1198
        %s1201 = sor.u32 256, 72
        %1202 = vbcast.lane.b32.xlu0 %v1195, %s1201
        %v1203 = vpop.permute.xlu0 %1202
        %v1204 = vlaneseq
        %v1205 = vshrl.u32 %v1204, 7
        %v1206 = vsub.s32 2, %v1205
        %v1207 = vrot.slane %v628, %v1206
        %s1209 = sor.u32 256, 64
        %1210 = vbcast.lane.b32.xlu0 %v1207, %s1209
        %v1211 = vpop.permute.xlu0 %1210
        %s1213 = sor.u32 256, 72
        %1214 = vbcast.lane.b32.xlu0 %v1207, %s1213
        %v1215 = vpop.permute.xlu0 %1214
        %v1216 = vlaneseq
        %v1217 = vshrl.u32 %v1216, 7
        %v1218 = vsub.s32 3, %v1217
        %v1219 = vrot.slane %v628, %v1218
        %s1221 = sor.u32 256, 64
        %1222 = vbcast.lane.b32.xlu0 %v1219, %s1221
        %v1223 = vpop.permute.xlu0 %1222
        %s1225 = sor.u32 256, 72
        %1226 = vbcast.lane.b32.xlu0 %v1219, %s1225
        %v1227 = vpop.permute.xlu0 %1226
        %v1228 = vlaneseq
        %v1229 = vshrl.u32 %v1228, 7
        %v1230 = vsub.s32 4, %v1229
        %v1231 = vrot.slane %v628, %v1230
        %s1233 = sor.u32 256, 64
        %1234 = vbcast.lane.b32.xlu0 %v1231, %s1233
        %v1235 = vpop.permute.xlu0 %1234
        %s1237 = sor.u32 256, 72
        %1238 = vbcast.lane.b32.xlu0 %v1231, %s1237
        %v1239 = vpop.permute.xlu0 %1238
        %v1240 = vlaneseq
        %v1241 = vshrl.u32 %v1240, 7
        %v1242 = vsub.s32 5, %v1241
        %v1243 = vrot.slane %v628, %v1242
        %s1245 = sor.u32 256, 64
        %1246 = vbcast.lane.b32.xlu0 %v1243, %s1245
        %v1247 = vpop.permute.xlu0 %1246
        %s1249 = sor.u32 256, 72
        %1250 = vbcast.lane.b32.xlu0 %v1243, %s1249
        %v1251 = vpop.permute.xlu0 %1250
        %v1252 = vlaneseq
        %v1253 = vshrl.u32 %v1252, 7
        %v1254 = vsub.s32 6, %v1253
        %v1255 = vrot.slane %v628, %v1254
        %s1257 = sor.u32 256, 64
        %1258 = vbcast.lane.b32.xlu0 %v1255, %s1257
        %v1259 = vpop.permute.xlu0 %1258
        %s1261 = sor.u32 256, 72
        %1262 = vbcast.lane.b32.xlu0 %v1255, %s1261
        %v1263 = vpop.permute.xlu0 %1262
        %v1264 = vlaneseq
        %v1265 = vshrl.u32 %v1264, 7
        %v1266 = vsub.s32 7, %v1265
        %v1267 = vrot.slane %v628, %v1266
        %s1269 = sor.u32 256, 64
        %1270 = vbcast.lane.b32.xlu0 %v1267, %s1269
        %v1271 = vpop.permute.xlu0 %1270
        %s1273 = sor.u32 256, 72
        %1274 = vbcast.lane.b32.xlu0 %v1267, %s1273
        %v1275 = vpop.permute.xlu0 %1274
        %v1276 = vlaneseq
        %v1277 = vshrl.u32 %v1276, 7
        %v1278 = vsub.s32 0, %v1277
        %v1279 = vrot.slane %v1009, %v1278
        %v1280 = vlaneseq
        %v1281 = vshrl.u32 %v1280, 7
        %v1282 = vsub.s32 0, %v1281
        %v1283 = vrot.slane %v1023, %v1282
        %v1284 = vlaneseq
        %v1285 = vshrl.u32 %v1284, 7
        %v1286 = vsub.s32 0, %v1285
        %v1287 = vrot.slane %v1031, %v1286
        %v1288 = vlaneseq
        %v1289 = vshrl.u32 %v1288, 7
        %v1290 = vsub.s32 0, %v1289
        %v1291 = vrot.slane %v1033, %v1290
        %v1292 = vlaneseq
        %v1293 = vshrl.u32 %v1292, 7
        %v1294 = vsub.s32 0, %v1293
        %v1295 = vrot.slane %v1016, %v1294
        %v1296 = vlaneseq
        %v1297 = vshrl.u32 %v1296, 7
        %v1298 = vsub.s32 0, %v1297
        %v1299 = vrot.slane %v1030, %v1298
        %v1300 = vlaneseq
        %v1301 = vshrl.u32 %v1300, 7
        %v1302 = vsub.s32 0, %v1301
        %v1303 = vrot.slane %v1032, %v1302
        %v1304 = vlaneseq
        %v1305 = vshrl.u32 %v1304, 7
        %v1306 = vsub.s32 0, %v1305
        %v1307 = vrot.slane %v1034, %v1306
        %v1308 = vlaneseq
        %v1309 = vshrl.u32 %v1308, 7
        %v1310 = vsub.s32 0, %v1309
        %v1311 = vrot.slane %v1058, %v1310
        %v1312 = vlaneseq
        %v1313 = vshrl.u32 %v1312, 7
        %v1314 = vsub.s32 0, %v1313
        %v1315 = vrot.slane %v1072, %v1314
        %v1316 = vlaneseq
        %v1317 = vshrl.u32 %v1316, 7
        %v1318 = vsub.s32 0, %v1317
        %v1319 = vrot.slane %v1080, %v1318
        %v1320 = vlaneseq
        %v1321 = vshrl.u32 %v1320, 7
        %v1322 = vsub.s32 0, %v1321
        %v1323 = vrot.slane %v1082, %v1322
        %v1324 = vlaneseq
        %v1325 = vshrl.u32 %v1324, 7
        %v1326 = vsub.s32 0, %v1325
        %v1327 = vrot.slane %v1065, %v1326
        %v1328 = vlaneseq
        %v1329 = vshrl.u32 %v1328, 7
        %v1330 = vsub.s32 0, %v1329
        %v1331 = vrot.slane %v1079, %v1330
        %v1332 = vlaneseq
        %v1333 = vshrl.u32 %v1332, 7
        %v1334 = vsub.s32 0, %v1333
        %v1335 = vrot.slane %v1081, %v1334
        %v1336 = vlaneseq
        %v1337 = vshrl.u32 %v1336, 7
        %v1338 = vsub.s32 0, %v1337
        %v1339 = vrot.slane %v1083, %v1338
        %v1356 = vmul.f32 %v1279, %v1091
        %v1357 = vmul.f32 %v1279, %v1095
        %v1358 = vmul.f32 %v1283, %v1103
        %v1359 = vmul.f32 %v1283, %v1107
        %v1360 = vmul.f32 %v1287, %v1115
        %v1361 = vmul.f32 %v1287, %v1119
        %v1362 = vmul.f32 %v1291, %v1127
        %v1363 = vmul.f32 %v1291, %v1131
        %v1364 = vmul.f32 %v1295, %v1139
        %v1365 = vmul.f32 %v1295, %v1143
        %v1366 = vmul.f32 %v1299, %v1151
        %v1367 = vmul.f32 %v1299, %v1155
        %v1368 = vmul.f32 %v1303, %v1163
        %v1369 = vmul.f32 %v1303, %v1167
        %v1370 = vmul.f32 %v1307, %v1175
        %v1371 = vmul.f32 %v1307, %v1179
        %v1372 = vmul.f32 %v1311, %v1187
        %v1373 = vmul.f32 %v1311, %v1191
        %v1374 = vmul.f32 %v1315, %v1199
        %v1375 = vmul.f32 %v1315, %v1203
        %v1376 = vmul.f32 %v1319, %v1211
        %v1377 = vmul.f32 %v1319, %v1215
        %v1378 = vmul.f32 %v1323, %v1223
        %v1379 = vmul.f32 %v1323, %v1227
        %v1380 = vmul.f32 %v1327, %v1235
        %v1381 = vmul.f32 %v1327, %v1239
        %v1382 = vmul.f32 %v1331, %v1247
        %v1383 = vmul.f32 %v1331, %v1251
        %v1384 = vmul.f32 %v1335, %v1259
        %v1385 = vmul.f32 %v1335, %v1263
        %v1386 = vmul.f32 %v1339, %v1271
        %v1387 = vmul.f32 %v1339, %v1275
        %1388 = vst.msk [vmem:[#allocation3] sm:$0xff] %vm586, %v1356
        %1389 = vst.msk [vmem:[#allocation3 + $0x8] sm:$0xff] %vm586, %v1357
        %1390 = vst.msk [vmem:[#allocation3 + $0x10] sm:$0xff] %vm586, %v1358
        %1391 = vst.msk [vmem:[#allocation3 + $0x18] sm:$0xff] %vm586, %v1359
        %1392 = vst.msk [vmem:[#allocation3 + $0x20] sm:$0xff] %vm586, %v1360
        %1393 = vst.msk [vmem:[#allocation3 + $0x28] sm:$0xff] %vm586, %v1361
        %1394 = vst.msk [vmem:[#allocation3 + $0x30] sm:$0xff] %vm586, %v1362
        %1395 = vst.msk [vmem:[#allocation3 + $0x38] sm:$0xff] %vm586, %v1363
        %1396 = vst.msk [vmem:[#allocation3 + $0x40] sm:$0xff] %vm586, %v1364
        %1397 = vst.msk [vmem:[#allocation3 + $0x48] sm:$0xff] %vm586, %v1365
        %1398 = vst.msk [vmem:[#allocation3 + $0x50] sm:$0xff] %vm586, %v1366
        %1399 = vst.msk [vmem:[#allocation3 + $0x58] sm:$0xff] %vm586, %v1367
        %1400 = vst.msk [vmem:[#allocation3 + $0x60] sm:$0xff] %vm586, %v1368
        %1401 = vst.msk [vmem:[#allocation3 + $0x68] sm:$0xff] %vm586, %v1369
        %1402 = vst.msk [vmem:[#allocation3 + $0x70] sm:$0xff] %vm586, %v1370
        %1403 = vst.msk [vmem:[#allocation3 + $0x78] sm:$0xff] %vm586, %v1371
        %1404 = vst.msk [vmem:[#allocation3 + $0x80] sm:$0xff] %vm586, %v1372
        %1405 = vst.msk [vmem:[#allocation3 + $0x88] sm:$0xff] %vm586, %v1373
        %1406 = vst.msk [vmem:[#allocation3 + $0x90] sm:$0xff] %vm586, %v1374
        %1407 = vst.msk [vmem:[#allocation3 + $0x98] sm:$0xff] %vm586, %v1375
        %1408 = vst.msk [vmem:[#allocation3 + $0xa0] sm:$0xff] %vm586, %v1376
        %1409 = vst.msk [vmem:[#allocation3 + $0xa8] sm:$0xff] %vm586, %v1377
        %1410 = vst.msk [vmem:[#allocation3 + $0xb0] sm:$0xff] %vm586, %v1378
        %1411 = vst.msk [vmem:[#allocation3 + $0xb8] sm:$0xff] %vm586, %v1379
        %1412 = vst.msk [vmem:[#allocation3 + $0xc0] sm:$0xff] %vm586, %v1380
        %1413 = vst.msk [vmem:[#allocation3 + $0xc8] sm:$0xff] %vm586, %v1381
        %1414 = vst.msk [vmem:[#allocation3 + $0xd0] sm:$0xff] %vm586, %v1382
        %1415 = vst.msk [vmem:[#allocation3 + $0xd8] sm:$0xff] %vm586, %v1383
        %1416 = vst.msk [vmem:[#allocation3 + $0xe0] sm:$0xff] %vm586, %v1384
        %1417 = vst.msk [vmem:[#allocation3 + $0xe8] sm:$0xff] %vm586, %v1385
        %1418 = vst.msk [vmem:[#allocation3 + $0xf0] sm:$0xff] %vm586, %v1386
        %1419 = vst.msk [vmem:[#allocation3 + $0xf8] sm:$0xff] %vm586, %v1387
        loop: start=0, step=1, limit=16
        $region73: #{tpu_custom_call.1} parent=55 // loop_pre_header
          _
        $region74: #{tpu_custom_call.1} parent=55 // loop_header
          %s1421 = sphi 0, %s1425
          %p1422 = scmp.ge.s32.totalorder %s1421, 16
          %v1426 = vphi 0.0, %v1437
          %v1427 = vphi 0.0, %v1438
        $region75: #{tpu_custom_call.1} parent=55 // loop_header_branch
          %1424 = sbr.rel (%p1422) target = $region79
        $region76: #{tpu_custom_call.1} parent=55 // loop_body
          %s1428 = smul.u32 %s1421, 16
          %s1429 = scalar_lea.vmem [#allocation2], %s1428
          %v1430 = vld [vmem:[%s1429] sm:$0xff]
          %v1431 = vld [vmem:[%s1429 + $0x8] sm:$0xff]
          %v1432 = vmul.f32 %v1430, %v1426
          %v1433 = vmul.f32 %v1431, %v1427
          %s1434 = scalar_lea.vmem [#allocation3], %s1428
          %v1435 = vld [vmem:[%s1434] sm:$0xff]
          %v1436 = vld [vmem:[%s1434 + $0x8] sm:$0xff]
          %v1437 = vadd.f32 %v1432, %v1435
          %v1438 = vadd.f32 %v1433, %v1436
          %1439 = vst.msk [vmem:[%s1429] sm:$0xff] %vm586, %v1437
          %1440 = vst.msk [vmem:[%s1429 + $0x8] sm:$0xff] %vm586, %v1438
        $region77: #{tpu_custom_call.1} parent=55 // loop_footer
          %s1425 = sadd.s32 1, %s1421
        $region78: #{tpu_custom_call.1} parent=55 // loop_footer_branch
          %1420 = sbr.rel target = $region74
        $region79: #{tpu_custom_call.1} parent=55 // loop_exit
          _
        %v1441 = vld [vmem:[#allocation2] sm:$0xff]
        %v1442 = vld [vmem:[#allocation2 + $0x8] sm:$0xff]
        %v1443 = vld [vmem:[#allocation2 + $0x10] sm:$0xff]
        %v1444 = vld [vmem:[#allocation2 + $0x18] sm:$0xff]
        %v1445 = vld [vmem:[#allocation2 + $0x20] sm:$0xff]
        %v1446 = vld [vmem:[#allocation2 + $0x28] sm:$0xff]
        %v1447 = vld [vmem:[#allocation2 + $0x30] sm:$0xff]
        %v1448 = vld [vmem:[#allocation2 + $0x38] sm:$0xff]
        %v1449 = vld [vmem:[#allocation2 + $0x40] sm:$0xff]
        %v1450 = vld [vmem:[#allocation2 + $0x48] sm:$0xff]
        %v1451 = vld [vmem:[#allocation2 + $0x50] sm:$0xff]
        %v1452 = vld [vmem:[#allocation2 + $0x58] sm:$0xff]
        %v1453 = vld [vmem:[#allocation2 + $0x60] sm:$0xff]
        %v1454 = vld [vmem:[#allocation2 + $0x68] sm:$0xff]
        %v1455 = vld [vmem:[#allocation2 + $0x70] sm:$0xff]
        %v1456 = vld [vmem:[#allocation2 + $0x78] sm:$0xff]
        %v1457 = vld [vmem:[#allocation2 + $0x80] sm:$0xff]
        %v1458 = vld [vmem:[#allocation2 + $0x88] sm:$0xff]
        %v1459 = vld [vmem:[#allocation2 + $0x90] sm:$0xff]
        %v1460 = vld [vmem:[#allocation2 + $0x98] sm:$0xff]
        %v1461 = vld [vmem:[#allocation2 + $0xa0] sm:$0xff]
        %v1462 = vld [vmem:[#allocation2 + $0xa8] sm:$0xff]
        %v1463 = vld [vmem:[#allocation2 + $0xb0] sm:$0xff]
        %v1464 = vld [vmem:[#allocation2 + $0xb8] sm:$0xff]
        %v1465 = vld [vmem:[#allocation2 + $0xc0] sm:$0xff]
        %v1466 = vld [vmem:[#allocation2 + $0xc8] sm:$0xff]
        %v1467 = vld [vmem:[#allocation2 + $0xd0] sm:$0xff]
        %v1468 = vld [vmem:[#allocation2 + $0xd8] sm:$0xff]
        %v1469 = vld [vmem:[#allocation2 + $0xe0] sm:$0xff]
        %v1470 = vld [vmem:[#allocation2 + $0xe8] sm:$0xff]
        %v1471 = vld [vmem:[#allocation2 + $0xf0] sm:$0xff]
        %v1472 = vld [vmem:[#allocation2 + $0xf8] sm:$0xff]
        %s1474 = sor.u32 256, 80
        %1475 = vbcast.lane.b32.xlu0 %v1087, %s1474
        %v1476 = vpop.permute.xlu0 %1475
        %s1478 = sor.u32 256, 88
        %1479 = vbcast.lane.b32.xlu0 %v1087, %s1478
        %v1480 = vpop.permute.xlu0 %1479
        %s1482 = sor.u32 256, 80
        %1483 = vbcast.lane.b32.xlu0 %v1099, %s1482
        %v1484 = vpop.permute.xlu0 %1483
        %s1486 = sor.u32 256, 88
        %1487 = vbcast.lane.b32.xlu0 %v1099, %s1486
        %v1488 = vpop.permute.xlu0 %1487
        %s1490 = sor.u32 256, 80
        %1491 = vbcast.lane.b32.xlu0 %v1111, %s1490
        %v1492 = vpop.permute.xlu0 %1491
        %s1494 = sor.u32 256, 88
        %1495 = vbcast.lane.b32.xlu0 %v1111, %s1494
        %v1496 = vpop.permute.xlu0 %1495
        %s1498 = sor.u32 256, 80
        %1499 = vbcast.lane.b32.xlu0 %v1123, %s1498
        %v1500 = vpop.permute.xlu0 %1499
        %s1502 = sor.u32 256, 88
        %1503 = vbcast.lane.b32.xlu0 %v1123, %s1502
        %v1504 = vpop.permute.xlu0 %1503
        %s1506 = sor.u32 256, 80
        %1507 = vbcast.lane.b32.xlu0 %v1135, %s1506
        %v1508 = vpop.permute.xlu0 %1507
        %s1510 = sor.u32 256, 88
        %1511 = vbcast.lane.b32.xlu0 %v1135, %s1510
        %v1512 = vpop.permute.xlu0 %1511
        %s1514 = sor.u32 256, 80
        %1515 = vbcast.lane.b32.xlu0 %v1147, %s1514
        %v1516 = vpop.permute.xlu0 %1515
        %s1518 = sor.u32 256, 88
        %1519 = vbcast.lane.b32.xlu0 %v1147, %s1518
        %v1520 = vpop.permute.xlu0 %1519
        %s1522 = sor.u32 256, 80
        %1523 = vbcast.lane.b32.xlu0 %v1159, %s1522
        %v1524 = vpop.permute.xlu0 %1523
        %s1526 = sor.u32 256, 88
        %1527 = vbcast.lane.b32.xlu0 %v1159, %s1526
        %v1528 = vpop.permute.xlu0 %1527
        %s1530 = sor.u32 256, 80
        %1531 = vbcast.lane.b32.xlu0 %v1171, %s1530
        %v1532 = vpop.permute.xlu0 %1531
        %s1534 = sor.u32 256, 88
        %1535 = vbcast.lane.b32.xlu0 %v1171, %s1534
        %v1536 = vpop.permute.xlu0 %1535
        %s1538 = sor.u32 256, 80
        %1539 = vbcast.lane.b32.xlu0 %v1183, %s1538
        %v1540 = vpop.permute.xlu0 %1539
        %s1542 = sor.u32 256, 88
        %1543 = vbcast.lane.b32.xlu0 %v1183, %s1542
        %v1544 = vpop.permute.xlu0 %1543
        %s1546 = sor.u32 256, 80
        %1547 = vbcast.lane.b32.xlu0 %v1195, %s1546
        %v1548 = vpop.permute.xlu0 %1547
        %s1550 = sor.u32 256, 88
        %1551 = vbcast.lane.b32.xlu0 %v1195, %s1550
        %v1552 = vpop.permute.xlu0 %1551
        %s1554 = sor.u32 256, 80
        %1555 = vbcast.lane.b32.xlu0 %v1207, %s1554
        %v1556 = vpop.permute.xlu0 %1555
        %s1558 = sor.u32 256, 88
        %1559 = vbcast.lane.b32.xlu0 %v1207, %s1558
        %v1560 = vpop.permute.xlu0 %1559
        %s1562 = sor.u32 256, 80
        %1563 = vbcast.lane.b32.xlu0 %v1219, %s1562
        %v1564 = vpop.permute.xlu0 %1563
        %s1566 = sor.u32 256, 88
        %1567 = vbcast.lane.b32.xlu0 %v1219, %s1566
        %v1568 = vpop.permute.xlu0 %1567
        %s1570 = sor.u32 256, 80
        %1571 = vbcast.lane.b32.xlu0 %v1231, %s1570
        %v1572 = vpop.permute.xlu0 %1571
        %s1574 = sor.u32 256, 88
        %1575 = vbcast.lane.b32.xlu0 %v1231, %s1574
        %v1576 = vpop.permute.xlu0 %1575
        %s1578 = sor.u32 256, 80
        %1579 = vbcast.lane.b32.xlu0 %v1243, %s1578
        %v1580 = vpop.permute.xlu0 %1579
        %s1582 = sor.u32 256, 88
        %1583 = vbcast.lane.b32.xlu0 %v1243, %s1582
        %v1584 = vpop.permute.xlu0 %1583
        %s1586 = sor.u32 256, 80
        %1587 = vbcast.lane.b32.xlu0 %v1255, %s1586
        %v1588 = vpop.permute.xlu0 %1587
        %s1590 = sor.u32 256, 88
        %1591 = vbcast.lane.b32.xlu0 %v1255, %s1590
        %v1592 = vpop.permute.xlu0 %1591
        %s1594 = sor.u32 256, 80
        %1595 = vbcast.lane.b32.xlu0 %v1267, %s1594
        %v1596 = vpop.permute.xlu0 %1595
        %s1598 = sor.u32 256, 88
        %1599 = vbcast.lane.b32.xlu0 %v1267, %s1598
        %v1600 = vpop.permute.xlu0 %1599
        %v1601 = vmul.f32 %v1441, %v1476
        %v1602 = vmul.f32 %v1442, %v1480
        %v1603 = vmul.f32 %v1443, %v1484
        %v1604 = vmul.f32 %v1444, %v1488
        %v1605 = vmul.f32 %v1445, %v1492
        %v1606 = vmul.f32 %v1446, %v1496
        %v1607 = vmul.f32 %v1447, %v1500
        %v1608 = vmul.f32 %v1448, %v1504
        %v1609 = vmul.f32 %v1449, %v1508
        %v1610 = vmul.f32 %v1450, %v1512
        %v1611 = vmul.f32 %v1451, %v1516
        %v1612 = vmul.f32 %v1452, %v1520
        %v1613 = vmul.f32 %v1453, %v1524
        %v1614 = vmul.f32 %v1454, %v1528
        %v1615 = vmul.f32 %v1455, %v1532
        %v1616 = vmul.f32 %v1456, %v1536
        %v1617 = vmul.f32 %v1457, %v1540
        %v1618 = vmul.f32 %v1458, %v1544
        %v1619 = vmul.f32 %v1459, %v1548
        %v1620 = vmul.f32 %v1460, %v1552
        %v1621 = vmul.f32 %v1461, %v1556
        %v1622 = vmul.f32 %v1462, %v1560
        %v1623 = vmul.f32 %v1463, %v1564
        %v1624 = vmul.f32 %v1464, %v1568
        %v1625 = vmul.f32 %v1465, %v1572
        %v1626 = vmul.f32 %v1466, %v1576
        %v1627 = vmul.f32 %v1467, %v1580
        %v1628 = vmul.f32 %v1468, %v1584
        %v1629 = vmul.f32 %v1469, %v1588
        %v1630 = vmul.f32 %v1470, %v1592
        %v1631 = vmul.f32 %v1471, %v1596
        %v1632 = vmul.f32 %v1472, %v1600
        %v1633 = vsel %vm586, %v1601, 0.0
        %v1634 = vsel %vm586, %v1602, 0.0
        %v1635 = vadd.f32 %v1633, %v1634
        %v1636 = vrot.slane %v1635, 4
        %v1637 = vadd.f32 %v1635, %v1636
        %v1638 = vrot.slane %v1637, 2
        %v1639 = vadd.f32 %v1637, %v1638
        %v1640 = vrot.slane %v1639, 1
        %v1641 = vadd.f32 %v1639, %v1640
        %v1642 = vsel %vm586, %v1603, 0.0
        %v1643 = vsel %vm586, %v1604, 0.0
        %v1644 = vadd.f32 %v1642, %v1643
        %v1645 = vrot.slane %v1644, 4
        %v1646 = vadd.f32 %v1644, %v1645
        %v1647 = vrot.slane %v1646, 2
        %v1648 = vadd.f32 %v1646, %v1647
        %v1649 = vrot.slane %v1648, 1
        %v1650 = vadd.f32 %v1648, %v1649
        %v1651 = vsel %vm586, %v1605, 0.0
        %v1652 = vsel %vm586, %v1606, 0.0
        %v1653 = vadd.f32 %v1651, %v1652
        %v1654 = vrot.slane %v1653, 4
        %v1655 = vadd.f32 %v1653, %v1654
        %v1656 = vrot.slane %v1655, 2
        %v1657 = vadd.f32 %v1655, %v1656
        %v1658 = vrot.slane %v1657, 1
        %v1659 = vadd.f32 %v1657, %v1658
        %v1660 = vsel %vm586, %v1607, 0.0
        %v1661 = vsel %vm586, %v1608, 0.0
        %v1662 = vadd.f32 %v1660, %v1661
        %v1663 = vrot.slane %v1662, 4
        %v1664 = vadd.f32 %v1662, %v1663
        %v1665 = vrot.slane %v1664, 2
        %v1666 = vadd.f32 %v1664, %v1665
        %v1667 = vrot.slane %v1666, 1
        %v1668 = vadd.f32 %v1666, %v1667
        %v1669 = vsel %vm586, %v1609, 0.0
        %v1670 = vsel %vm586, %v1610, 0.0
        %v1671 = vadd.f32 %v1669, %v1670
        %v1672 = vrot.slane %v1671, 4
        %v1673 = vadd.f32 %v1671, %v1672
        %v1674 = vrot.slane %v1673, 2
        %v1675 = vadd.f32 %v1673, %v1674
        %v1676 = vrot.slane %v1675, 1
        %v1677 = vadd.f32 %v1675, %v1676
        %v1678 = vsel %vm586, %v1611, 0.0
        %v1679 = vsel %vm586, %v1612, 0.0
        %v1680 = vadd.f32 %v1678, %v1679
        %v1681 = vrot.slane %v1680, 4
        %v1682 = vadd.f32 %v1680, %v1681
        %v1683 = vrot.slane %v1682, 2
        %v1684 = vadd.f32 %v1682, %v1683
        %v1685 = vrot.slane %v1684, 1
        %v1686 = vadd.f32 %v1684, %v1685
        %v1687 = vsel %vm586, %v1613, 0.0
        %v1688 = vsel %vm586, %v1614, 0.0
        %v1689 = vadd.f32 %v1687, %v1688
        %v1690 = vrot.slane %v1689, 4
        %v1691 = vadd.f32 %v1689, %v1690
        %v1692 = vrot.slane %v1691, 2
        %v1693 = vadd.f32 %v1691, %v1692
        %v1694 = vrot.slane %v1693, 1
        %v1695 = vadd.f32 %v1693, %v1694
        %v1696 = vsel %vm586, %v1615, 0.0
        %v1697 = vsel %vm586, %v1616, 0.0
        %v1698 = vadd.f32 %v1696, %v1697
        %v1699 = vrot.slane %v1698, 4
        %v1700 = vadd.f32 %v1698, %v1699
        %v1701 = vrot.slane %v1700, 2
        %v1702 = vadd.f32 %v1700, %v1701
        %v1703 = vrot.slane %v1702, 1
        %v1704 = vadd.f32 %v1702, %v1703
        %v1705 = vsel %vm586, %v1617, 0.0
        %v1706 = vsel %vm586, %v1618, 0.0
        %v1707 = vadd.f32 %v1705, %v1706
        %v1708 = vrot.slane %v1707, 4
        %v1709 = vadd.f32 %v1707, %v1708
        %v1710 = vrot.slane %v1709, 2
        %v1711 = vadd.f32 %v1709, %v1710
        %v1712 = vrot.slane %v1711, 1
        %v1713 = vadd.f32 %v1711, %v1712
        %v1714 = vsel %vm586, %v1619, 0.0
        %v1715 = vsel %vm586, %v1620, 0.0
        %v1716 = vadd.f32 %v1714, %v1715
        %v1717 = vrot.slane %v1716, 4
        %v1718 = vadd.f32 %v1716, %v1717
        %v1719 = vrot.slane %v1718, 2
        %v1720 = vadd.f32 %v1718, %v1719
        %v1721 = vrot.slane %v1720, 1
        %v1722 = vadd.f32 %v1720, %v1721
        %v1723 = vsel %vm586, %v1621, 0.0
        %v1724 = vsel %vm586, %v1622, 0.0
        %v1725 = vadd.f32 %v1723, %v1724
        %v1726 = vrot.slane %v1725, 4
        %v1727 = vadd.f32 %v1725, %v1726
        %v1728 = vrot.slane %v1727, 2
        %v1729 = vadd.f32 %v1727, %v1728
        %v1730 = vrot.slane %v1729, 1
        %v1731 = vadd.f32 %v1729, %v1730
        %v1732 = vsel %vm586, %v1623, 0.0
        %v1733 = vsel %vm586, %v1624, 0.0
        %v1734 = vadd.f32 %v1732, %v1733
        %v1735 = vrot.slane %v1734, 4
        %v1736 = vadd.f32 %v1734, %v1735
        %v1737 = vrot.slane %v1736, 2
        %v1738 = vadd.f32 %v1736, %v1737
        %v1739 = vrot.slane %v1738, 1
        %v1740 = vadd.f32 %v1738, %v1739
        %v1741 = vsel %vm586, %v1625, 0.0
        %v1742 = vsel %vm586, %v1626, 0.0
        %v1743 = vadd.f32 %v1741, %v1742
        %v1744 = vrot.slane %v1743, 4
        %v1745 = vadd.f32 %v1743, %v1744
        %v1746 = vrot.slane %v1745, 2
        %v1747 = vadd.f32 %v1745, %v1746
        %v1748 = vrot.slane %v1747, 1
        %v1749 = vadd.f32 %v1747, %v1748
        %v1750 = vsel %vm586, %v1627, 0.0
        %v1751 = vsel %vm586, %v1628, 0.0
        %v1752 = vadd.f32 %v1750, %v1751
        %v1753 = vrot.slane %v1752, 4
        %v1754 = vadd.f32 %v1752, %v1753
        %v1755 = vrot.slane %v1754, 2
        %v1756 = vadd.f32 %v1754, %v1755
        %v1757 = vrot.slane %v1756, 1
        %v1758 = vadd.f32 %v1756, %v1757
        %v1759 = vsel %vm586, %v1629, 0.0
        %v1760 = vsel %vm586, %v1630, 0.0
        %v1761 = vadd.f32 %v1759, %v1760
        %v1762 = vrot.slane %v1761, 4
        %v1763 = vadd.f32 %v1761, %v1762
        %v1764 = vrot.slane %v1763, 2
        %v1765 = vadd.f32 %v1763, %v1764
        %v1766 = vrot.slane %v1765, 1
        %v1767 = vadd.f32 %v1765, %v1766
        %v1768 = vsel %vm586, %v1631, 0.0
        %v1769 = vsel %vm586, %v1632, 0.0
        %v1770 = vadd.f32 %v1768, %v1769
        %v1771 = vrot.slane %v1770, 4
        %v1772 = vadd.f32 %v1770, %v1771
        %v1773 = vrot.slane %v1772, 2
        %v1774 = vadd.f32 %v1772, %v1773
        %v1775 = vrot.slane %v1774, 1
        %v1776 = vadd.f32 %v1774, %v1775
        %v1777 = vld [vmem:[%s7] sm:$0x1]
        %v1779 = vlaneseq
        %v1780 = vshrl.u32 %v1779, 7
        %v1781 = vsub.s32 0, %v1780
        %v1782 = vrot.slane %v1777, %v1781
        %v1784 = vmul.f32 %v551, %v1782
        %v1785 = vmul.f32 %v552, %v1782
        %v1788 = vrot.slane %v1784, 1
        %v1789 = vrot.slane %v1784, 2
        %v1790 = vrot.slane %v1784, 3
        %v1791 = vrot.slane %v1784, 4
        %v1792 = vrot.slane %v1784, 5
        %v1793 = vrot.slane %v1784, 6
        %v1794 = vrot.slane %v1784, 7
        %v1795 = vrot.slane %v1785, 1
        %v1796 = vrot.slane %v1785, 2
        %v1797 = vrot.slane %v1785, 3
        %v1798 = vrot.slane %v1785, 4
        %v1799 = vrot.slane %v1785, 5
        %v1800 = vrot.slane %v1785, 6
        %v1801 = vrot.slane %v1785, 7
        %v1818 = vadd.f32 %v1641, %v1784
        %v1819 = vadd.f32 %v1650, %v1788
        %v1820 = vadd.f32 %v1659, %v1789
        %v1821 = vadd.f32 %v1668, %v1790
        %v1822 = vadd.f32 %v1677, %v1791
        %v1823 = vadd.f32 %v1686, %v1792
        %v1824 = vadd.f32 %v1695, %v1793
        %v1825 = vadd.f32 %v1704, %v1794
        %v1826 = vadd.f32 %v1713, %v1785
        %v1827 = vadd.f32 %v1722, %v1795
        %v1828 = vadd.f32 %v1731, %v1796
        %v1829 = vadd.f32 %v1740, %v1797
        %v1830 = vadd.f32 %v1749, %v1798
        %v1831 = vadd.f32 %v1758, %v1799
        %v1832 = vadd.f32 %v1767, %v1800
        %v1833 = vadd.f32 %v1776, %v1801
        %v1836 = vrot.slane %v674, 1
        %v1837 = vrot.slane %v674, 2
        %v1838 = vrot.slane %v674, 3
        %v1839 = vrot.slane %v674, 4
        %v1840 = vrot.slane %v674, 5
        %v1841 = vrot.slane %v674, 6
        %v1842 = vrot.slane %v674, 7
        %v1843 = vrot.slane %v675, 1
        %v1844 = vrot.slane %v675, 2
        %v1845 = vrot.slane %v675, 3
        %v1846 = vrot.slane %v675, 4
        %v1847 = vrot.slane %v675, 5
        %v1848 = vrot.slane %v675, 6
        %v1849 = vrot.slane %v675, 7
        %1850 = vrot.lane.b32.xlu0 %v674, 64
        %v1851 = vpop.permute.xlu0 %1850
        %1852 = vrot.lane.b32.xlu0 %v1836, 64
        %v1853 = vpop.permute.xlu0 %1852
        %1854 = vrot.lane.b32.xlu0 %v1837, 64
        %v1855 = vpop.permute.xlu0 %1854
        %1856 = vrot.lane.b32.xlu0 %v1838, 64
        %v1857 = vpop.permute.xlu0 %1856
        %1858 = vrot.lane.b32.xlu0 %v1839, 64
        %v1859 = vpop.permute.xlu0 %1858
        %1860 = vrot.lane.b32.xlu0 %v1840, 64
        %v1861 = vpop.permute.xlu0 %1860
        %1862 = vrot.lane.b32.xlu0 %v1841, 64
        %v1863 = vpop.permute.xlu0 %1862
        %1864 = vrot.lane.b32.xlu0 %v1842, 64
        %v1865 = vpop.permute.xlu0 %1864
        %1866 = vrot.lane.b32.xlu0 %v675, 64
        %v1867 = vpop.permute.xlu0 %1866
        %1868 = vrot.lane.b32.xlu0 %v1843, 64
        %v1869 = vpop.permute.xlu0 %1868
        %1870 = vrot.lane.b32.xlu0 %v1844, 64
        %v1871 = vpop.permute.xlu0 %1870
        %1872 = vrot.lane.b32.xlu0 %v1845, 64
        %v1873 = vpop.permute.xlu0 %1872
        %1874 = vrot.lane.b32.xlu0 %v1846, 64
        %v1875 = vpop.permute.xlu0 %1874
        %1876 = vrot.lane.b32.xlu0 %v1847, 64
        %v1877 = vpop.permute.xlu0 %1876
        %1878 = vrot.lane.b32.xlu0 %v1848, 64
        %v1879 = vpop.permute.xlu0 %1878
        %1880 = vrot.lane.b32.xlu0 %v1849, 64
        %v1881 = vpop.permute.xlu0 %1880
        %v1898 = vmul.f32 %v1818, %v1851
        %v1899 = vmul.f32 %v1819, %v1853
        %v1900 = vmul.f32 %v1820, %v1855
        %v1901 = vmul.f32 %v1821, %v1857
        %v1902 = vmul.f32 %v1822, %v1859
        %v1903 = vmul.f32 %v1823, %v1861
        %v1904 = vmul.f32 %v1824, %v1863
        %v1905 = vmul.f32 %v1825, %v1865
        %v1906 = vmul.f32 %v1826, %v1867
        %v1907 = vmul.f32 %v1827, %v1869
        %v1908 = vmul.f32 %v1828, %v1871
        %v1909 = vmul.f32 %v1829, %v1873
        %v1910 = vmul.f32 %v1830, %v1875
        %v1911 = vmul.f32 %v1831, %v1877
        %v1912 = vmul.f32 %v1832, %v1879
        %v1913 = vmul.f32 %v1833, %v1881
        %v1914 = vpack.c.bf16 %v1898, %v1898
        %v1915 = vpack.c.bf16 %v1899, %v1899
        %v1916 = vpack.c.bf16 %v1900, %v1900
        %v1917 = vpack.c.bf16 %v1901, %v1901
        %v1918 = vpack.c.bf16 %v1902, %v1902
        %v1919 = vpack.c.bf16 %v1903, %v1903
        %v1920 = vpack.c.bf16 %v1904, %v1904
        %v1921 = vpack.c.bf16 %v1905, %v1905
        %v1922 = vpack.c.bf16 %v1906, %v1906
        %v1923 = vpack.c.bf16 %v1907, %v1907
        %v1924 = vpack.c.bf16 %v1908, %v1908
        %v1925 = vpack.c.bf16 %v1909, %v1909
        %v1926 = vpack.c.bf16 %v1910, %v1910
        %v1927 = vpack.c.bf16 %v1911, %v1911
        %v1928 = vpack.c.bf16 %v1912, %v1912
        %v1929 = vpack.c.bf16 %v1913, %v1913
        %v1930 = vld [vmem:[#allocation10] sm:$0xf]
        %v1931 = vld [vmem:[#allocation10 + $0x4] sm:$0xf]
        %v1932 = vld [vmem:[#allocation10 + $0x8] sm:$0xf]
        %v1933 = vld [vmem:[#allocation10 + $0xc] sm:$0xf]
        %v1934 = vld [vmem:[#allocation10 + $0x10] sm:$0xf]
        %v1935 = vld [vmem:[#allocation10 + $0x14] sm:$0xf]
        %v1936 = vld [vmem:[#allocation10 + $0x18] sm:$0xf]
        %v1937 = vld [vmem:[#allocation10 + $0x1c] sm:$0xf]
        %v1954 = vunpack.c.l.b16 %v1914
        %v1955 = vunpack.c.l.b16 %v1915
        %v1956 = vunpack.c.l.b16 %v1916
        %v1957 = vunpack.c.l.b16 %v1917
        %v1958 = vunpack.c.l.b16 %v1918
        %v1959 = vunpack.c.l.b16 %v1919
        %v1960 = vunpack.c.l.b16 %v1920
        %v1961 = vunpack.c.l.b16 %v1921
        %v1962 = vunpack.c.l.b16 %v1922
        %v1963 = vunpack.c.l.b16 %v1923
        %v1964 = vunpack.c.l.b16 %v1924
        %v1965 = vunpack.c.l.b16 %v1925
        %v1966 = vunpack.c.l.b16 %v1926
        %v1967 = vunpack.c.l.b16 %v1927
        %v1968 = vunpack.c.l.b16 %v1928
        %v1969 = vunpack.c.l.b16 %v1929
        %v1970 = vrot.slane %v1955, 7
        %vm1971 = vcmask 1041409
        %v1972 = vsel %vm1971, %v1970, %v1954
        %v1973 = vrot.slane %v1956, 6
        %vm1974 = vcmask 1042434
        %v1975 = vsel %vm1974, %v1973, %v1972
        %v1976 = vrot.slane %v1957, 5
        %vm1977 = vcmask 1043459
        %v1978 = vsel %vm1977, %v1976, %v1975
        %v1979 = vrot.slane %v1958, 4
        %vm1980 = vcmask 1044484
        %v1981 = vsel %vm1980, %v1979, %v1978
        %v1982 = vrot.slane %v1959, 3
        %vm1983 = vcmask 1045509
        %v1984 = vsel %vm1983, %v1982, %v1981
        %v1985 = vrot.slane %v1960, 2
        %vm1986 = vcmask 1046534
        %v1987 = vsel %vm1986, %v1985, %v1984
        %v1988 = vrot.slane %v1961, 1
        %vm1989 = vcmask 1047559
        %v1990 = vsel %vm1989, %v1988, %v1987
        %v1991 = vrot.slane %v1963, 7
        %v1992 = vsel %vm1971, %v1991, %v1962
        %v1993 = vrot.slane %v1964, 6
        %v1994 = vsel %vm1974, %v1993, %v1992
        %v1995 = vrot.slane %v1965, 5
        %v1996 = vsel %vm1977, %v1995, %v1994
        %v1997 = vrot.slane %v1966, 4
        %v1998 = vsel %vm1980, %v1997, %v1996
        %v1999 = vrot.slane %v1967, 3
        %v2000 = vsel %vm1983, %v1999, %v1998
        %v2001 = vrot.slane %v1968, 2
        %v2002 = vsel %vm1986, %v2001, %v2000
        %v2003 = vrot.slane %v1969, 1
        %v2004 = vsel %vm1989, %v2003, %v2002
        %v2005 = vpack.c.b16 %v2004, %v1990
        %v2014 = vunpack.c.l.b16 %v1930
        %v2015 = vunpack.c.l.b16 %v1931
        %v2016 = vunpack.c.l.b16 %v1932
        %v2017 = vunpack.c.l.b16 %v1933
        %v2018 = vunpack.c.l.b16 %v1934
        %v2019 = vunpack.c.l.b16 %v1935
        %v2020 = vunpack.c.l.b16 %v1936
        %v2021 = vunpack.c.l.b16 %v1937
        %v2022 = vpack.c.b16 %v2015, %v2014
        %v2023 = vpack.c.b16 %v2017, %v2016
        %v2024 = vpack.c.b16 %v2019, %v2018
        %v2025 = vpack.c.b16 %v2021, %v2020
        %v2031 = vsel %vm586, %v2005, 0
        %2033 = vmatprep.subr.bf16.mxu0 0
        %2034 = vmatpush1.bf16.msra.mxu0 %v2022
        %2035 = vmatprep.subr.bf16.mxu0 0
        %2036 = vmatpush1.bf16.msra.mxu0 %v2023
        %2037 = vmatprep.subr.bf16.mxu0 0
        %2038 = vmatpush1.bf16.msra.mxu0 %v2024
        %2039 = vmatprep.subr.bf16.mxu0 0
        %2040 = vmatpush1.bf16.msra.mxu0 %v2025
        %2041 = vmatprep.subr.bf16.mxu0 0
        %2042 = vmatpush1.bf16.msra.mxu0 0
        %2043 = vmatprep.subr.bf16.mxu0 0
        %2044 = vmatpush1.bf16.msra.mxu0 0
        %2045 = vmatprep.subr.bf16.mxu0 0
        %2046 = vmatpush1.bf16.msra.mxu0 0
        %2047 = vmatprep.subr.bf16.mxu0 0
        %2048 = vmatpush1.bf16.msra.mxu0 0
        %2049 = vmatprep.subr.bf16.mxu0 0
        %2050 = vmatpush1.bf16.msra.mxu0 0
        %2051 = vmatprep.subr.bf16.mxu0 0
        %2052 = vmatpush1.bf16.msra.mxu0 0
        %2053 = vmatprep.subr.bf16.mxu0 0
        %2054 = vmatpush1.bf16.msra.mxu0 0
        %2055 = vmatprep.subr.bf16.mxu0 0
        %2056 = vmatpush1.bf16.msra.mxu0 0
        %2057 = vmatprep.subr.bf16.mxu0 0
        %2058 = vmatpush1.bf16.msra.mxu0 0
        %2059 = vmatprep.subr.bf16.mxu0 0
        %2060 = vmatpush1.bf16.msra.mxu0 0
        %2061 = vmatprep.subr.bf16.mxu0 0
        %2062 = vmatpush1.bf16.msra.mxu0 0
        %2063 = vmatprep.subr.bf16.mxu0 0
        %2064 = vmatpush1.bf16.msra.mxu0 0
        %2065 = vmatprep.mubr.bf16.mxu0 0
        %2066 = vmatmul.mubr.bf16.gmra.mrb[0].mxu0 %v2031
        %v2067 = vpop.f32.mrb[0].mxu0
        %v2068 = vadd.f32 0.0, %v2067
        %v2069 = vpop.f32.mrb[0].mxu0
        %v2070 = vpop.f32.mrb[0].mxu0
        %v2071 = vadd.f32 0.0, %v2070
        %v2072 = vpop.f32.mrb[0].mxu0
        %2073 = vdwg.mxu0
        %2074 = vst [vmem:[%s394] sm:$0xff] %v2068
        %2075 = vst [vmem:[%s394 + $0x8] sm:$0xff] %v2071
        %s2076 = sand.u32 %s230, 1
        %s2077 = scalar_lea.sflag [#allocation6], %s2076
        %s2078 = sand.u32 %s230, 1
        %s2079 = smul.addr %s2078, 16
        %s2080 = scalar_lea.vmem [#allocation12], %s2079
        // Predicated region
        $region80: #{tpu_custom_call.1} parent=55 // pred_check
          %p2081 = pneg %p240
        $region81: #{tpu_custom_call.1} parent=55 // pred_check_branch
          %2083 = sbr.rel (%p2081) target = $region83
        $region82: #{tpu_custom_call.1} parent=55 // pred_region
          %s2085 = ssub.s32 256, 256
          %2086 = vsyncadd %s2077, %s2085
          %s2087 = smul.addr %s28, 2
          %s2088 = smul.addr %s2087, 128
          %s2089 = scalar_lea.hbm %s9, %s2088
          %s2090 = sshll.u32 %s2080, 4
          %s2091 = int_to_ptr.vmem [resolvable:$true] %s2090
          %2096 = dma.vmem_to_hbm [thread:$0]  %s2091, 256, %s2089, %s2077, 128, 128, 8
        $region83: #{tpu_custom_call.1} parent=55 // pred_fallthru
          _
      $region56: #{tpu_custom_call.1} parent=5 // pred_fallthru
        _
      %p2097 = scmp.le.s32.totalorder 2, %s23
      // Predicated region
      $region84: #{tpu_custom_call.1} parent=5 // pred_check
        %p2098 = pneg %p2097
      $region85: #{tpu_custom_call.1} parent=5 // pred_check_branch
        %2100 = sbr.rel (%p2098) target = $region87
      $region86: #{tpu_custom_call.1} parent=5 // pred_region
        %s2101 = ssub.s32 %s23, 2
        // Predicated region
        $region88: #{tpu_custom_call.1} parent=86 // pred_check
          %p2102 = pneg %p246
        $region89: #{tpu_custom_call.1} parent=86 // pred_check_branch
          %2104 = sbr.rel (%p2102) target = $region91
        $region90: #{tpu_custom_call.1} parent=86 // pred_region
          %s2105 = sand.u32 %s231, 1
          %s2106 = scalar_lea.sflag [#allocation6], %s2105
          %s2107 = sand.u32 %s231, 1
          %s2108 = smul.addr %s2107, 16
          %s2109 = scalar_lea.vmem [#allocation12], %s2108
          %2110 = dma.done %s2106, 256
        $region91: #{tpu_custom_call.1} parent=86 // pred_fallthru
          _
      $region87: #{tpu_custom_call.1} parent=5 // pred_fallthru
        _
    $region6: #{tpu_custom_call.1} parent=1 // loop_footer
      %s27 = sadd.s32 1, %s23
    $region7: #{tpu_custom_call.1} parent=1 // loop_footer_branch
      %22 = sbr.rel target = $region3
    $region8: #{tpu_custom_call.1} parent=1 // loop_exit
      _
    %2111 = vsyncpa [#allocation5], 1
    %s2112 = scalar_lea.sflag [#allocation5], 1
    %2113 = vsyncpa %s2112, 1
    %2114 = vsyncpa [#allocation8], 1
    %2115 = vsyncpa [#allocation11], 1
    %2116 = vsyncpa [#allocation6], 1
    %s2117 = scalar_lea.sflag [#allocation6], 1
    %2118 = vsyncpa %s2117, 1

</llo_original>
